<compile_context>
chip_gen: v7x
topology: tpu7x:2x2x1
jax: 0.10.0
libtpu: 0.0.40
codegen_flags: <defaults>
</compile_context>

<pallas_src>
import jax
import jax.numpy as jnp
import numpy as np
from jax.experimental import pallas as pl
from jax.experimental.pallas import tpu as pltpu

DROPOUT_P = 0.2
BN_EPS = 1e-5
OUT_PAD = 128  # 10 output classes padded to a full lane width

# Static lane offsets into the packed (1, 2816) parameter vector.
# Layout: b1(512) g1(512) bt1(512) b2(256) g2(256) bt2(256)
#         b3(128) g3(128) bt3(128) b4(128, padded from 10)
_OFF_B1, _OFF_G1, _OFF_BT1 = 0, 512, 1024
_OFF_B2, _OFF_G2, _OFF_BT2 = 1536, 1792, 2048
_OFF_B3, _OFF_G3, _OFF_BT3 = 2304, 2432, 2560
_OFF_B4 = 2688
_PVEC_LEN = 2816


def mlp_kernel(x_ref, m1_ref, m2_ref, m3_ref,
               w1_ref, w2_ref, w3_ref, w4_ref,
               p_ref, out_ref):
    inv_b = 1.0 / x_ref.shape[0]   # static batch size

    def pvec(start, size):
        # Static, 128-lane-aligned slice of the packed parameter vector.
        return p_ref[:, start:start + size]

    def linear_relu(h16, w_ref, b):
        # bf16 x bf16 MXU matmul with f32 accumulation.
        z = jnp.dot(h16, w_ref[...], preferred_element_type=jnp.float32)
        return jnp.maximum(z + b, 0.0)

    def batchnorm_train(h, g, bt):
        # Training-mode BatchNorm1d (biased batch variance, eps=1e-5),
        # as two reductions + one scale/shift pass (rsqrt on the EUP).
        mean = jnp.sum(h, axis=0, keepdims=True) * inv_b
        ex2 = jnp.sum(h * h, axis=0, keepdims=True) * inv_b
        var = jnp.maximum(ex2 - mean * mean, 0.0)
        scale = g * jax.lax.rsqrt(var + BN_EPS)
        shift = bt - mean * scale
        return h * scale + shift

    def dropout_cast(h, m_ref):
        # Cast to bf16 first, then multiply by the bf16 keep-mask (0/1).
        # The 1/(1-p) scale is folded into the next layer's weights.
        return h.astype(jnp.bfloat16) * m_ref[...]

    x16 = x_ref[...].astype(jnp.bfloat16)

    h = linear_relu(x16, w1_ref, pvec(_OFF_B1, 512))
    h = batchnorm_train(h, pvec(_OFF_G1, 512), pvec(_OFF_BT1, 512))
    h16 = dropout_cast(h, m1_ref)

    h = linear_relu(h16, w2_ref, pvec(_OFF_B2, 256))
    h = batchnorm_train(h, pvec(_OFF_G2, 256), pvec(_OFF_BT2, 256))
    h16 = dropout_cast(h, m2_ref)

    h = linear_relu(h16, w3_ref, pvec(_OFF_B3, 128))
    h = batchnorm_train(h, pvec(_OFF_G3, 128), pvec(_OFF_BT3, 128))
    h16 = dropout_cast(h, m3_ref)

    # fc_layer_4 followed by ReLU (the module re-uses activation_func_3 here).
    out_ref[...] = linear_relu(h16, w4_ref, pvec(_OFF_B4, OUT_PAD))


@jax.jit
def method_mlp_forward(x, prepared, m1, m2, m3):
    """x: (B, 784) f32; prepared: dict from prepare_params; m*: bf16 keep masks."""
    B = x.shape[0]
    vmem = pl.BlockSpec(memory_space=pltpu.MemorySpace.VMEM)

    in_arrays = (x, m1, m2, m3,
                 prepared["w1"], prepared["w2"], prepared["w3"], prepared["w4"],
                 prepared["pvec"])

    out = pl.pallas_call(
        mlp_kernel,
        in_specs=[vmem] * len(in_arrays),
        out_specs=vmem,
        out_shape=jax.ShapeDtypeStruct((B, OUT_PAD), jnp.float32),
    )(*in_arrays)
    return out[:, :10]


def init_params(key):
    """PyTorch-default-style init. Weights stored (in_features, out_features)."""
    dims = [(784, 512), (512, 256), (256, 128), (128, 10)]
    params = {}
    keys = jax.random.split(key, 2 * len(dims))
    for idx, (fan_in, fan_out) in enumerate(dims):
        bound = 1.0 / float(np.sqrt(fan_in))
        w = jax.random.uniform(keys[2 * idx], (fan_in, fan_out),
                               minval=-bound, maxval=bound, dtype=jnp.float32)
        b = jax.random.uniform(keys[2 * idx + 1], (1, fan_out),
                               minval=-bound, maxval=bound, dtype=jnp.float32)
        params[f"w{idx + 1}"] = w
        params[f"b{idx + 1}"] = b
        if idx < 3:  # BatchNorm only after the first three layers
            params[f"g{idx + 1}"] = jnp.ones((1, fan_out), jnp.float32)
            params[f"bt{idx + 1}"] = jnp.zeros((1, fan_out), jnp.float32)
    return params


def prepare_params(params):
    """Scale / cast / pack parameters once, host-side, for the kernel layout."""
    inv_keep = 1.0 / (1.0 - DROPOUT_P)

    # One lane-aligned packed vector for all small (1, N) f32 parameters.
    pvec = jnp.concatenate(
        [params["b1"], params["g1"], params["bt1"],
         params["b2"], params["g2"], params["bt2"],
         params["b3"], params["g3"], params["bt3"],
         jnp.pad(params["b4"], ((0, 0), (0, OUT_PAD - 10)))],
        axis=1)
    assert pvec.shape == (1, _PVEC_LEN)

    return {
        # Layer 1: unpadded (784, 512) bf16 (x is cast in-kernel).
        "w1": params["w1"].astype(jnp.bfloat16),
        # Layers 2/3/4: fold the 1/(1-p) dropout scale of the preceding dropout.
        "w2": (params["w2"] * inv_keep).astype(jnp.bfloat16),
        "w3": (params["w3"] * inv_keep).astype(jnp.bfloat16),
        "w4": jnp.pad(params["w4"] * inv_keep,
                      ((0, 0), (0, OUT_PAD - 10))).astype(jnp.bfloat16),
        "pvec": pvec,
    }


def reference_forward(x, params, m1, m2, m3):
    """Pure-JAX f32 reference with identical dropout masks."""
    inv_keep = 1.0 / (1.0 - DROPOUT_P)

    def block(h, w, b, g, bt, m):
        h = jnp.maximum(h @ w + b, 0.0)
        mean = jnp.mean(h, axis=0, keepdims=True)
        var = jnp.mean((h - mean) ** 2, axis=0, keepdims=True)
        h = (h - mean) / jnp.sqrt(var + BN_EPS) * g + bt
        return h * m.astype(jnp.float32) * inv_keep

    h = block(x, params["w1"], params["b1"], params["g1"], params["bt1"], m1)
    h = block(h, params["w2"], params["b2"], params["g2"], params["bt2"], m2)
    h = block(h, params["w3"], params["b3"], params["g3"], params["bt3"], m3)
    return jnp.maximum(h @ params["w4"] + params["b4"], 0.0)


if __name__ == "__main__":
    key = jax.random.PRNGKey(0)
    pkey, xkey, dkey = jax.random.split(key, 3)

    params = init_params(pkey)
    prepared = prepare_params(params)

    batch = 8  # small, sublane-aligned example batch
    x = jax.random.normal(xkey, (batch, 784), dtype=jnp.float32)

    k1, k2, k3 = jax.random.split(dkey, 3)
    m1 = jax.random.bernoulli(k1, 1.0 - DROPOUT_P, (batch, 512)).astype(jnp.bfloat16)
    m2 = jax.random.bernoulli(k2, 1.0 - DROPOUT_P, (batch, 256)).astype(jnp.bfloat16)
    m3 = jax.random.bernoulli(k3, 1.0 - DROPOUT_P, (batch, 128)).astype(jnp.bfloat16)

    y = method_mlp_forward(x, prepared, m1, m2, m3)
    y = jax.block_until_ready(y)

    ref = reference_forward(x, params, m1, m2, m3)

    assert y.shape == (batch, 10)
    assert y.dtype == jnp.float32
    assert bool(jnp.all(jnp.isfinite(y)))
    assert bool(jnp.all(y >= 0.0))  # final ReLU
    np.testing.assert_allclose(np.asarray(y), np.asarray(ref), rtol=2e-1, atol=2e-1)

    print("KERNEL_OK")
</pallas_src>

<mosaic_0001>
module attributes {stable_mosaic.version = 11 : i64} {
  func.func @mlp_kernel(%arg0: memref<8x784xf32, #tpu.memory_space<vmem>>, %arg1: memref<8x512xbf16, #tpu.memory_space<vmem>>, %arg2: memref<8x256xbf16, #tpu.memory_space<vmem>>, %arg3: memref<8x128xbf16, #tpu.memory_space<vmem>>, %arg4: memref<784x512xbf16, #tpu.memory_space<vmem>>, %arg5: memref<512x256xbf16, #tpu.memory_space<vmem>>, %arg6: memref<256x128xbf16, #tpu.memory_space<vmem>>, %arg7: memref<128x128xbf16, #tpu.memory_space<vmem>>, %arg8: memref<1x2816xf32, #tpu.memory_space<vmem>>, %arg9: memref<8x128xf32, #tpu.memory_space<vmem>>) attributes {dimension_semantics = [], scalar_prefetch = 0 : i64, scratch_operands = 0 : i64, tpu.core_type = #tpu.core_type<tc>} {
    %c0 = arith.constant 0 : index
    %c0_0 = arith.constant 0 : index
    %0 = vector.load %arg0[%c0, %c0_0] : memref<8x784xf32, #tpu.memory_space<vmem>>, vector<8x784xf32>
    %1 = arith.truncf %0 : vector<8x784xf32> to vector<8x784xbf16>
    %c0_1 = arith.constant 0 : index
    %c0_2 = arith.constant 0 : index
    %2 = vector.load %arg8[%c0_1, %c0_2] : memref<1x2816xf32, #tpu.memory_space<vmem>>, vector<1x512xf32>
    %c0_3 = arith.constant 0 : index
    %c0_4 = arith.constant 0 : index
    %3 = vector.load %arg4[%c0_3, %c0_4] : memref<784x512xbf16, #tpu.memory_space<vmem>>, vector<784x512xbf16>
    %cst = arith.constant dense<0.000000e+00> : vector<8x512xf32>
    %4 = tpu.matmul %1, %3, %cst {dimension_numbers = #tpu.dot_dimension_numbers<[1], [0], [0], [1], [0, 0, 1, 1], [], []>} : vector<8x784xbf16>, vector<784x512xbf16>, vector<8x512xf32> -> vector<8x512xf32>
    %5 = vector.broadcast %2 : vector<1x512xf32> to vector<8x512xf32>
    %6 = arith.addf %4, %5 : vector<8x512xf32>
    %cst_5 = arith.constant 0.000000e+00 : f32
    %7 = vector.broadcast %cst_5 : f32 to vector<8x512xf32>
    %8 = arith.maximumf %6, %7 : vector<8x512xf32>
    %c0_6 = arith.constant 0 : index
    %c512 = arith.constant 512 : index
    %9 = vector.load %arg8[%c0_6, %c512] : memref<1x2816xf32, #tpu.memory_space<vmem>>, vector<1x512xf32>
    %c0_7 = arith.constant 0 : index
    %c1024 = arith.constant 1024 : index
    %10 = vector.load %arg8[%c0_7, %c1024] : memref<1x2816xf32, #tpu.memory_space<vmem>>, vector<1x512xf32>
    %cst_8 = arith.constant dense<0.000000e+00> : vector<512xf32>
    %11 = vector.multi_reduction <add>, %8, %cst_8 [0] : vector<8x512xf32> to vector<512xf32>
    %12 = vector.shape_cast %11 : vector<512xf32> to vector<1x512xf32>
    %cst_9 = arith.constant 1.250000e-01 : f32
    %13 = vector.broadcast %cst_9 : f32 to vector<1x512xf32>
    %14 = arith.mulf %12, %13 : vector<1x512xf32>
    %15 = arith.mulf %8, %8 : vector<8x512xf32>
    %cst_10 = arith.constant dense<0.000000e+00> : vector<512xf32>
    %16 = vector.multi_reduction <add>, %15, %cst_10 [0] : vector<8x512xf32> to vector<512xf32>
    %17 = vector.shape_cast %16 : vector<512xf32> to vector<1x512xf32>
    %cst_11 = arith.constant 1.250000e-01 : f32
    %18 = vector.broadcast %cst_11 : f32 to vector<1x512xf32>
    %19 = arith.mulf %17, %18 : vector<1x512xf32>
    %20 = arith.mulf %14, %14 : vector<1x512xf32>
    %21 = arith.subf %19, %20 : vector<1x512xf32>
    %cst_12 = arith.constant 0.000000e+00 : f32
    %22 = vector.broadcast %cst_12 : f32 to vector<1x512xf32>
    %23 = arith.maximumf %21, %22 : vector<1x512xf32>
    %cst_13 = arith.constant 9.99999974E-6 : f32
    %24 = vector.broadcast %cst_13 : f32 to vector<1x512xf32>
    %25 = arith.addf %23, %24 : vector<1x512xf32>
    %26 = math.rsqrt %25 : vector<1x512xf32>
    %27 = arith.mulf %9, %26 : vector<1x512xf32>
    %28 = arith.mulf %14, %27 : vector<1x512xf32>
    %29 = arith.subf %10, %28 : vector<1x512xf32>
    %30 = vector.broadcast %27 : vector<1x512xf32> to vector<8x512xf32>
    %31 = arith.mulf %8, %30 : vector<8x512xf32>
    %32 = vector.broadcast %29 : vector<1x512xf32> to vector<8x512xf32>
    %33 = arith.addf %31, %32 : vector<8x512xf32>
    %34 = arith.truncf %33 : vector<8x512xf32> to vector<8x512xbf16>
    %c0_14 = arith.constant 0 : index
    %c0_15 = arith.constant 0 : index
    %35 = vector.load %arg1[%c0_14, %c0_15] : memref<8x512xbf16, #tpu.memory_space<vmem>>, vector<8x512xbf16>
    %36 = arith.mulf %34, %35 : vector<8x512xbf16>
    %c0_16 = arith.constant 0 : index
    %c1536 = arith.constant 1536 : index
    %37 = vector.load %arg8[%c0_16, %c1536] : memref<1x2816xf32, #tpu.memory_space<vmem>>, vector<1x256xf32>
    %c0_17 = arith.constant 0 : index
    %c0_18 = arith.constant 0 : index
    %38 = vector.load %arg5[%c0_17, %c0_18] : memref<512x256xbf16, #tpu.memory_space<vmem>>, vector<512x256xbf16>
    %cst_19 = arith.constant dense<0.000000e+00> : vector<8x256xf32>
    %39 = tpu.matmul %36, %38, %cst_19 {dimension_numbers = #tpu.dot_dimension_numbers<[1], [0], [0], [1], [0, 0, 1, 1], [], []>} : vector<8x512xbf16>, vector<512x256xbf16>, vector<8x256xf32> -> vector<8x256xf32>
    %40 = vector.broadcast %37 : vector<1x256xf32> to vector<8x256xf32>
    %41 = arith.addf %39, %40 : vector<8x256xf32>
    %cst_20 = arith.constant 0.000000e+00 : f32
    %42 = vector.broadcast %cst_20 : f32 to vector<8x256xf32>
    %43 = arith.maximumf %41, %42 : vector<8x256xf32>
    %c0_21 = arith.constant 0 : index
    %c1792 = arith.constant 1792 : index
    %44 = vector.load %arg8[%c0_21, %c1792] : memref<1x2816xf32, #tpu.memory_space<vmem>>, vector<1x256xf32>
    %c0_22 = arith.constant 0 : index
    %c2048 = arith.constant 2048 : index
    %45 = vector.load %arg8[%c0_22, %c2048] : memref<1x2816xf32, #tpu.memory_space<vmem>>, vector<1x256xf32>
    %cst_23 = arith.constant dense<0.000000e+00> : vector<256xf32>
    %46 = vector.multi_reduction <add>, %43, %cst_23 [0] : vector<8x256xf32> to vector<256xf32>
    %47 = vector.shape_cast %46 : vector<256xf32> to vector<1x256xf32>
    %cst_24 = arith.constant 1.250000e-01 : f32
    %48 = vector.broadcast %cst_24 : f32 to vector<1x256xf32>
    %49 = arith.mulf %47, %48 : vector<1x256xf32>
    %50 = arith.mulf %43, %43 : vector<8x256xf32>
    %cst_25 = arith.constant dense<0.000000e+00> : vector<256xf32>
    %51 = vector.multi_reduction <add>, %50, %cst_25 [0] : vector<8x256xf32> to vector<256xf32>
    %52 = vector.shape_cast %51 : vector<256xf32> to vector<1x256xf32>
    %cst_26 = arith.constant 1.250000e-01 : f32
    %53 = vector.broadcast %cst_26 : f32 to vector<1x256xf32>
    %54 = arith.mulf %52, %53 : vector<1x256xf32>
    %55 = arith.mulf %49, %49 : vector<1x256xf32>
    %56 = arith.subf %54, %55 : vector<1x256xf32>
    %cst_27 = arith.constant 0.000000e+00 : f32
    %57 = vector.broadcast %cst_27 : f32 to vector<1x256xf32>
    %58 = arith.maximumf %56, %57 : vector<1x256xf32>
    %cst_28 = arith.constant 9.99999974E-6 : f32
    %59 = vector.broadcast %cst_28 : f32 to vector<1x256xf32>
    %60 = arith.addf %58, %59 : vector<1x256xf32>
    %61 = math.rsqrt %60 : vector<1x256xf32>
    %62 = arith.mulf %44, %61 : vector<1x256xf32>
    %63 = arith.mulf %49, %62 : vector<1x256xf32>
    %64 = arith.subf %45, %63 : vector<1x256xf32>
    %65 = vector.broadcast %62 : vector<1x256xf32> to vector<8x256xf32>
    %66 = arith.mulf %43, %65 : vector<8x256xf32>
    %67 = vector.broadcast %64 : vector<1x256xf32> to vector<8x256xf32>
    %68 = arith.addf %66, %67 : vector<8x256xf32>
    %69 = arith.truncf %68 : vector<8x256xf32> to vector<8x256xbf16>
    %c0_29 = arith.constant 0 : index
    %c0_30 = arith.constant 0 : index
    %70 = vector.load %arg2[%c0_29, %c0_30] : memref<8x256xbf16, #tpu.memory_space<vmem>>, vector<8x256xbf16>
    %71 = arith.mulf %69, %70 : vector<8x256xbf16>
    %c0_31 = arith.constant 0 : index
    %c2304 = arith.constant 2304 : index
    %72 = vector.load %arg8[%c0_31, %c2304] : memref<1x2816xf32, #tpu.memory_space<vmem>>, vector<1x128xf32>
    %c0_32 = arith.constant 0 : index
    %c0_33 = arith.constant 0 : index
    %73 = vector.load %arg6[%c0_32, %c0_33] : memref<256x128xbf16, #tpu.memory_space<vmem>>, vector<256x128xbf16>
    %cst_34 = arith.constant dense<0.000000e+00> : vector<8x128xf32>
    %74 = tpu.matmul %71, %73, %cst_34 {dimension_numbers = #tpu.dot_dimension_numbers<[1], [0], [0], [1], [0, 0, 1, 1], [], []>} : vector<8x256xbf16>, vector<256x128xbf16>, vector<8x128xf32> -> vector<8x128xf32>
    %75 = vector.broadcast %72 : vector<1x128xf32> to vector<8x128xf32>
    %76 = arith.addf %74, %75 : vector<8x128xf32>
    %cst_35 = arith.constant 0.000000e+00 : f32
    %77 = vector.broadcast %cst_35 : f32 to vector<8x128xf32>
    %78 = arith.maximumf %76, %77 : vector<8x128xf32>
    %c0_36 = arith.constant 0 : index
    %c2432 = arith.constant 2432 : index
    %79 = vector.load %arg8[%c0_36, %c2432] : memref<1x2816xf32, #tpu.memory_space<vmem>>, vector<1x128xf32>
    %c0_37 = arith.constant 0 : index
    %c2560 = arith.constant 2560 : index
    %80 = vector.load %arg8[%c0_37, %c2560] : memref<1x2816xf32, #tpu.memory_space<vmem>>, vector<1x128xf32>
    %cst_38 = arith.constant dense<0.000000e+00> : vector<128xf32>
    %81 = vector.multi_reduction <add>, %78, %cst_38 [0] : vector<8x128xf32> to vector<128xf32>
    %82 = vector.shape_cast %81 : vector<128xf32> to vector<1x128xf32>
    %cst_39 = arith.constant 1.250000e-01 : f32
    %83 = vector.broadcast %cst_39 : f32 to vector<1x128xf32>
    %84 = arith.mulf %82, %83 : vector<1x128xf32>
    %85 = arith.mulf %78, %78 : vector<8x128xf32>
    %cst_40 = arith.constant dense<0.000000e+00> : vector<128xf32>
    %86 = vector.multi_reduction <add>, %85, %cst_40 [0] : vector<8x128xf32> to vector<128xf32>
    %87 = vector.shape_cast %86 : vector<128xf32> to vector<1x128xf32>
    %cst_41 = arith.constant 1.250000e-01 : f32
    %88 = vector.broadcast %cst_41 : f32 to vector<1x128xf32>
    %89 = arith.mulf %87, %88 : vector<1x128xf32>
    %90 = arith.mulf %84, %84 : vector<1x128xf32>
    %91 = arith.subf %89, %90 : vector<1x128xf32>
    %cst_42 = arith.constant 0.000000e+00 : f32
    %92 = vector.broadcast %cst_42 : f32 to vector<1x128xf32>
    %93 = arith.maximumf %91, %92 : vector<1x128xf32>
    %cst_43 = arith.constant 9.99999974E-6 : f32
    %94 = vector.broadcast %cst_43 : f32 to vector<1x128xf32>
    %95 = arith.addf %93, %94 : vector<1x128xf32>
    %96 = math.rsqrt %95 : vector<1x128xf32>
    %97 = arith.mulf %79, %96 : vector<1x128xf32>
    %98 = arith.mulf %84, %97 : vector<1x128xf32>
    %99 = arith.subf %80, %98 : vector<1x128xf32>
    %100 = vector.broadcast %97 : vector<1x128xf32> to vector<8x128xf32>
    %101 = arith.mulf %78, %100 : vector<8x128xf32>
    %102 = vector.broadcast %99 : vector<1x128xf32> to vector<8x128xf32>
    %103 = arith.addf %101, %102 : vector<8x128xf32>
    %104 = arith.truncf %103 : vector<8x128xf32> to vector<8x128xbf16>
    %c0_44 = arith.constant 0 : index
    %c0_45 = arith.constant 0 : index
    %105 = vector.load %arg3[%c0_44, %c0_45] : memref<8x128xbf16, #tpu.memory_space<vmem>>, vector<8x128xbf16>
    %106 = arith.mulf %104, %105 : vector<8x128xbf16>
    %c0_46 = arith.constant 0 : index
    %c2688 = arith.constant 2688 : index
    %107 = vector.load %arg8[%c0_46, %c2688] : memref<1x2816xf32, #tpu.memory_space<vmem>>, vector<1x128xf32>
    %c0_47 = arith.constant 0 : index
    %c0_48 = arith.constant 0 : index
    %108 = vector.load %arg7[%c0_47, %c0_48] : memref<128x128xbf16, #tpu.memory_space<vmem>>, vector<128x128xbf16>
    %cst_49 = arith.constant dense<0.000000e+00> : vector<8x128xf32>
    %109 = tpu.matmul %106, %108, %cst_49 {dimension_numbers = #tpu.dot_dimension_numbers<[1], [0], [0], [1], [0, 0, 1, 1], [], []>} : vector<8x128xbf16>, vector<128x128xbf16>, vector<8x128xf32> -> vector<8x128xf32>
    %110 = vector.broadcast %107 : vector<1x128xf32> to vector<8x128xf32>
    %111 = arith.addf %109, %110 : vector<8x128xf32>
    %cst_50 = arith.constant 0.000000e+00 : f32
    %112 = vector.broadcast %cst_50 : f32 to vector<8x128xf32>
    %113 = arith.maximumf %111, %112 : vector<8x128xf32>
    %c0_51 = arith.constant 0 : index
    %c0_52 = arith.constant 0 : index
    %114 = vector.load %arg9[%c0_51, %c0_52] : memref<8x128xf32, #tpu.memory_space<vmem>>, vector<8x128xf32>
    tpu.vector_store %arg9[%c0_51, %c0_52], %113 {strides = array<i32>} : memref<8x128xf32, #tpu.memory_space<vmem>>, vector<8x128xf32>,
    return
  }
}

</mosaic_0001>

<llo_original>
// kernel: method_mlp_forward.1
$region0: #{method_mlp_forward.1}
  #allocation0 [shape = 'u32[]', space=smem, size = 0x4, offset = 0x4, fixed_abs, tag = 'smem constant byte address 0x4 - core index']
  #allocation1 [shape = 'u32[144,128]{1,0:T(1,128)}', space=vmem, size = 0x12000, scoped, tag = 'internal scratch']
  %s0 = inlined_call_operand.hbm [shape: f32[8,784], index: 0, kind: input, shape index: {}]
  %s1 = inlined_call_operand.vmem [shape: bf16[8,512], index: 1, kind: input, shape index: {}]
  %s2 = inlined_call_operand.vmem [shape: bf16[8,256], index: 2, kind: input, shape index: {}]
  %s3 = inlined_call_operand.vmem [shape: bf16[8,128], index: 3, kind: input, shape index: {}]
  %s4 = inlined_call_operand.hbm [shape: bf16[784,512], index: 4, kind: input, shape index: {}]
  %s5 = inlined_call_operand.hbm [shape: bf16[512,256], index: 5, kind: input, shape index: {}]
  %s6 = inlined_call_operand.hbm [shape: bf16[256,128], index: 6, kind: input, shape index: {}]
  %s7 = inlined_call_operand.hbm [shape: bf16[128,128], index: 7, kind: input, shape index: {}]
  %s8 = inlined_call_operand.hbm [shape: f32[1,2816], index: 8, kind: input, shape index: {}]
  %s9 = inlined_call_operand.hbm [shape: f32[8,128], index: 9, kind: output, shape index: {}]
  %s10 = sld [smem:[#allocation0]]
  $region70: #{method_mlp_forward.1} parent=0
    _
  %s12 = ssub.s32 1, %s10
  %s13 = scalar_select 0, %s12, %s10
  $region1: #{method_mlp_forward.1} parent=0
    #allocation2 [shape = 'u8[28672]{0}', space=vmem, size = 0x7000, scoped, tag = 'input window, operand 0, single buffered']
    #allocation3 [shape = 's32[1]{0}', space=sflag, size = 0x4, scoped, tag = 'scoped memory for method_mlp_forward.1']
    #allocation4 [shape = 's32[1]{0}', space=sflag, size = 0x4, scoped, tag = 'scoped memory for method_mlp_forward.1']
    #allocation5 [shape = 'u8[802816]{0}', space=vmem, size = 0xc4000, scoped, tag = 'input window, operand 4, single buffered']
    #allocation6 [shape = 's32[1]{0}', space=sflag, size = 0x4, scoped, tag = 'scoped memory for method_mlp_forward.1']
    #allocation7 [shape = 'u8[262144]{0}', space=vmem, size = 0x40000, scoped, tag = 'input window, operand 5, single buffered']
    #allocation8 [shape = 'u8[65536]{0}', space=vmem, size = 0x10000, scoped, tag = 'input window, operand 6, single buffered']
    #allocation9 [shape = 's32[1]{0}', space=sflag, size = 0x4, scoped, tag = 'scoped memory for method_mlp_forward.1']
    #allocation10 [shape = 'u8[32768]{0}', space=vmem, size = 0x8000, scoped, tag = 'input window, operand 7, single buffered']
    #allocation11 [shape = 'u8[11264]{0}', space=vmem, size = 0x2c00, scoped, tag = 'input window, operand 8, single buffered']
    #allocation12 [shape = 's32[1]{0}', space=sflag, size = 0x4, scoped, tag = 'scoped memory for method_mlp_forward.1']
    #allocation13 [shape = 'u8[4096]{0}', space=vmem, size = 0x1000, scoped, tag = 'output window, operand 0, single buffered']
    %14 = vsyncpa [#allocation3], 0
    %15 = vsyncpa [#allocation6], 0
    %16 = vsyncpa [#allocation9], 0
    %17 = vsyncpa [#allocation12], 0
    %18 = vsyncpa [#allocation4], 0
    // Predicated region
    $region2: #{method_mlp_forward.1} parent=1 // pred_check
      _
    $region3: #{method_mlp_forward.1} parent=1 // pred_check_branch
      %20 = sbr.rel (0) target = $region5
    $region4: #{method_mlp_forward.1} parent=1 // pred_region
      %s22 = ssub.s32 896, 896
      %23 = vsyncadd [#allocation3], %s22
      %s25 = sshll.u32 [#allocation2], 4
      %s26 = int_to_ptr.vmem [resolvable:$true] %s25
      %28 = dma.hbm_to_vmem [thread:$0]  %s0, 896, %s26, [#allocation3]
    $region5: #{method_mlp_forward.1} parent=1 // pred_fallthru
      _
    // Predicated region
    $region6: #{method_mlp_forward.1} parent=1 // pred_check
      _
    $region7: #{method_mlp_forward.1} parent=1 // pred_check_branch
      %30 = sbr.rel (0) target = $region9
    $region8: #{method_mlp_forward.1} parent=1 // pred_region
      _
    $region9: #{method_mlp_forward.1} parent=1 // pred_fallthru
      _
    // Predicated region
    $region10: #{method_mlp_forward.1} parent=1 // pred_check
      _
    $region11: #{method_mlp_forward.1} parent=1 // pred_check_branch
      %32 = sbr.rel (0) target = $region13
    $region12: #{method_mlp_forward.1} parent=1 // pred_region
      _
    $region13: #{method_mlp_forward.1} parent=1 // pred_fallthru
      _
    // Predicated region
    $region14: #{method_mlp_forward.1} parent=1 // pred_check
      _
    $region15: #{method_mlp_forward.1} parent=1 // pred_check_branch
      %34 = sbr.rel (0) target = $region17
    $region16: #{method_mlp_forward.1} parent=1 // pred_region
      _
    $region17: #{method_mlp_forward.1} parent=1 // pred_fallthru
      _
    // Predicated region
    $region18: #{method_mlp_forward.1} parent=1 // pred_check
      _
    $region19: #{method_mlp_forward.1} parent=1 // pred_check_branch
      %36 = sbr.rel (0) target = $region21
    $region20: #{method_mlp_forward.1} parent=1 // pred_region
      %s38 = ssub.s32 25088, 25088
      %39 = vsyncadd [#allocation6], %s38
      %s40 = sshll.u32 [#allocation5], 4
      %s41 = int_to_ptr.vmem [resolvable:$true] %s40
      %46 = dma.hbm_to_vmem [thread:$0]  %s4, 25088, %s41, [#allocation6], 256, 256, 16
    $region21: #{method_mlp_forward.1} parent=1 // pred_fallthru
      _
    // Predicated region
    $region22: #{method_mlp_forward.1} parent=1 // pred_check
      _
    $region23: #{method_mlp_forward.1} parent=1 // pred_check_branch
      %48 = sbr.rel (0) target = $region25
    $region24: #{method_mlp_forward.1} parent=1 // pred_region
      %s50 = ssub.s32 8192, 8192
      %51 = vsyncadd [#allocation6], %s50
      %s52 = sshll.u32 [#allocation7], 4
      %s53 = int_to_ptr.vmem [resolvable:$true] %s52
      %58 = dma.hbm_to_vmem [thread:$0]  %s5, 8192, %s53, [#allocation6], 128, 128, 8
    $region25: #{method_mlp_forward.1} parent=1 // pred_fallthru
      _
    // Predicated region
    $region26: #{method_mlp_forward.1} parent=1 // pred_check
      _
    $region27: #{method_mlp_forward.1} parent=1 // pred_check_branch
      %60 = sbr.rel (0) target = $region29
    $region28: #{method_mlp_forward.1} parent=1 // pred_region
      %s62 = ssub.s32 2048, 2048
      %63 = vsyncadd [#allocation9], %s62
      %s64 = sshll.u32 [#allocation8], 4
      %s65 = int_to_ptr.vmem [resolvable:$true] %s64
      %70 = dma.hbm_to_vmem [thread:$0]  %s6, 2048, %s65, [#allocation9], 64, 64, 4
    $region29: #{method_mlp_forward.1} parent=1 // pred_fallthru
      _
    // Predicated region
    $region30: #{method_mlp_forward.1} parent=1 // pred_check
      _
    $region31: #{method_mlp_forward.1} parent=1 // pred_check_branch
      %72 = sbr.rel (0) target = $region33
    $region32: #{method_mlp_forward.1} parent=1 // pred_region
      %s74 = ssub.s32 1024, 1024
      %75 = vsyncadd [#allocation9], %s74
      %s76 = sshll.u32 [#allocation10], 4
      %s77 = int_to_ptr.vmem [resolvable:$true] %s76
      %82 = dma.hbm_to_vmem [thread:$0]  %s7, 1024, %s77, [#allocation9], 64, 64, 4
    $region33: #{method_mlp_forward.1} parent=1 // pred_fallthru
      _
    // Predicated region
    $region34: #{method_mlp_forward.1} parent=1 // pred_check
      _
    $region35: #{method_mlp_forward.1} parent=1 // pred_check_branch
      %84 = sbr.rel (0) target = $region37
    $region36: #{method_mlp_forward.1} parent=1 // pred_region
      %s86 = ssub.s32 352, 352
      %87 = vsyncadd [#allocation12], %s86
      %s89 = sshll.u32 [#allocation11], 4
      %s90 = int_to_ptr.vmem [resolvable:$true] %s89
      %92 = dma.hbm_to_vmem [thread:$0]  %s8, 352, %s90, [#allocation12]
    $region37: #{method_mlp_forward.1} parent=1 // pred_fallthru
      _
    // Predicated region
    $region38: #{method_mlp_forward.1} parent=1 // pred_check
      _
    $region39: #{method_mlp_forward.1} parent=1 // pred_check_branch
      %94 = sbr.rel (0) target = $region41
    $region40: #{method_mlp_forward.1} parent=1 // pred_region
      %95 = dma.done [#allocation3], 896
    $region41: #{method_mlp_forward.1} parent=1 // pred_fallthru
      _
    // Predicated region
    $region42: #{method_mlp_forward.1} parent=1 // pred_check
      _
    $region43: #{method_mlp_forward.1} parent=1 // pred_check_branch
      %97 = sbr.rel (0) target = $region45
    $region44: #{method_mlp_forward.1} parent=1 // pred_region
      %98 = dma.done [#allocation6], 25088
    $region45: #{method_mlp_forward.1} parent=1 // pred_fallthru
      _
    // Predicated region
    $region46: #{method_mlp_forward.1} parent=1 // pred_check
      _
    $region47: #{method_mlp_forward.1} parent=1 // pred_check_branch
      %100 = sbr.rel (0) target = $region49
    $region48: #{method_mlp_forward.1} parent=1 // pred_region
      %101 = dma.done [#allocation6], 8192
    $region49: #{method_mlp_forward.1} parent=1 // pred_fallthru
      _
    // Predicated region
    $region50: #{method_mlp_forward.1} parent=1 // pred_check
      _
    $region51: #{method_mlp_forward.1} parent=1 // pred_check_branch
      %103 = sbr.rel (0) target = $region53
    $region52: #{method_mlp_forward.1} parent=1 // pred_region
      %104 = dma.done [#allocation9], 2048
    $region53: #{method_mlp_forward.1} parent=1 // pred_fallthru
      _
    // Predicated region
    $region54: #{method_mlp_forward.1} parent=1 // pred_check
      _
    $region55: #{method_mlp_forward.1} parent=1 // pred_check_branch
      %106 = sbr.rel (0) target = $region57
    $region56: #{method_mlp_forward.1} parent=1 // pred_region
      %107 = dma.done [#allocation9], 1024
    $region57: #{method_mlp_forward.1} parent=1 // pred_fallthru
      _
    // Predicated region
    $region58: #{method_mlp_forward.1} parent=1 // pred_check
      _
    $region59: #{method_mlp_forward.1} parent=1 // pred_check_branch
      %109 = sbr.rel (0) target = $region61
    $region60: #{method_mlp_forward.1} parent=1 // pred_region
      %110 = dma.done [#allocation12], 352
    $region61: #{method_mlp_forward.1} parent=1 // pred_fallthru
      _
    %v112 = vld [vmem:[#allocation2] sm:$0xff]
    %v113 = vld [vmem:[#allocation2 + $0x8] sm:$0xff]
    %v114 = vld [vmem:[#allocation2 + $0x10] sm:$0xff]
    %v115 = vld [vmem:[#allocation2 + $0x18] sm:$0xff]
    %v116 = vld [vmem:[#allocation2 + $0x20] sm:$0xff]
    %v117 = vld [vmem:[#allocation2 + $0x28] sm:$0xff]
    %v118 = vld [vmem:[#allocation2 + $0x30] sm:$0xff]
    %v119 = vpack.c.bf16 %v112, %v112
    %v120 = vpack.c.bf16 %v113, %v113
    %v121 = vpack.c.bf16 %v114, %v114
    %v122 = vpack.c.bf16 %v115, %v115
    %v123 = vpack.c.bf16 %v116, %v116
    %v124 = vpack.c.bf16 %v117, %v117
    %v125 = vpack.c.bf16 %v118, %v118
    %v126 = vld [vmem:[#allocation11] sm:$0xf]
    %v127 = vld [vmem:[#allocation5] sm:$0xff]
    %v128 = vld [vmem:[#allocation5 + $0x8] sm:$0xff]
    %v129 = vld [vmem:[#allocation5 + $0x10] sm:$0xff]
    %v130 = vld [vmem:[#allocation5 + $0x18] sm:$0xff]
    %v131 = vld [vmem:[#allocation5 + $0x20] sm:$0xff]
    %v132 = vld [vmem:[#allocation5 + $0x28] sm:$0xff]
    %v133 = vld [vmem:[#allocation5 + $0x30] sm:$0xff]
    %v134 = vld [vmem:[#allocation5 + $0x38] sm:$0xff]
    %v135 = vld [vmem:[#allocation5 + $0x40] sm:$0xff]
    %v136 = vld [vmem:[#allocation5 + $0x48] sm:$0xff]
    %v137 = vld [vmem:[#allocation5 + $0x50] sm:$0xff]
    %v138 = vld [vmem:[#allocation5 + $0x58] sm:$0xff]
    %v139 = vld [vmem:[#allocation5 + $0x60] sm:$0xff]
    %v140 = vld [vmem:[#allocation5 + $0x68] sm:$0xff]
    %v141 = vld [vmem:[#allocation5 + $0x70] sm:$0xff]
    %v142 = vld [vmem:[#allocation5 + $0x78] sm:$0xff]
    %v143 = vld [vmem:[#allocation5 + $0x80] sm:$0xff]
    %v144 = vld [vmem:[#allocation5 + $0x88] sm:$0xff]
    %v145 = vld [vmem:[#allocation5 + $0x90] sm:$0xff]
    %v146 = vld [vmem:[#allocation5 + $0x98] sm:$0xff]
    %v147 = vld [vmem:[#allocation5 + $0xa0] sm:$0xff]
    %v148 = vld [vmem:[#allocation5 + $0xa8] sm:$0xff]
    %v149 = vld [vmem:[#allocation5 + $0xb0] sm:$0xff]
    %v150 = vld [vmem:[#allocation5 + $0xb8] sm:$0xff]
    %v151 = vld [vmem:[#allocation5 + $0xc0] sm:$0xff]
    %v152 = vld [vmem:[#allocation5 + $0xc8] sm:$0xff]
    %v153 = vld [vmem:[#allocation5 + $0xd0] sm:$0xff]
    %v154 = vld [vmem:[#allocation5 + $0xd8] sm:$0xff]
    %v155 = vld [vmem:[#allocation5 + $0xe0] sm:$0xff]
    %v156 = vld [vmem:[#allocation5 + $0xe8] sm:$0xff]
    %v157 = vld [vmem:[#allocation5 + $0xf0] sm:$0xff]
    %v158 = vld [vmem:[#allocation5 + $0xf8] sm:$0xff]
    %v159 = vld [vmem:[#allocation5 + $0x100] sm:$0xff]
    %v160 = vld [vmem:[#allocation5 + $0x108] sm:$0xff]
    %v161 = vld [vmem:[#allocation5 + $0x110] sm:$0xff]
    %v162 = vld [vmem:[#allocation5 + $0x118] sm:$0xff]
    %v163 = vld [vmem:[#allocation5 + $0x120] sm:$0xff]
    %v164 = vld [vmem:[#allocation5 + $0x128] sm:$0xff]
    %v165 = vld [vmem:[#allocation5 + $0x130] sm:$0xff]
    %v166 = vld [vmem:[#allocation5 + $0x138] sm:$0xff]
    %v167 = vld [vmem:[#allocation5 + $0x140] sm:$0xff]
    %v168 = vld [vmem:[#allocation5 + $0x148] sm:$0xff]
    %v169 = vld [vmem:[#allocation5 + $0x150] sm:$0xff]
    %v170 = vld [vmem:[#allocation5 + $0x158] sm:$0xff]
    %v171 = vld [vmem:[#allocation5 + $0x160] sm:$0xff]
    %v172 = vld [vmem:[#allocation5 + $0x168] sm:$0xff]
    %v173 = vld [vmem:[#allocation5 + $0x170] sm:$0xff]
    %v174 = vld [vmem:[#allocation5 + $0x178] sm:$0xff]
    %v175 = vld [vmem:[#allocation5 + $0x180] sm:$0xff]
    %v176 = vld [vmem:[#allocation5 + $0x188] sm:$0xff]
    %v177 = vld [vmem:[#allocation5 + $0x190] sm:$0xff]
    %v178 = vld [vmem:[#allocation5 + $0x198] sm:$0xff]
    %v179 = vld [vmem:[#allocation5 + $0x1a0] sm:$0xff]
    %v180 = vld [vmem:[#allocation5 + $0x1a8] sm:$0xff]
    %v181 = vld [vmem:[#allocation5 + $0x1b0] sm:$0xff]
    %v182 = vld [vmem:[#allocation5 + $0x1b8] sm:$0xff]
    %v183 = vld [vmem:[#allocation5 + $0x1c0] sm:$0xff]
    %v184 = vld [vmem:[#allocation5 + $0x1c8] sm:$0xff]
    %v185 = vld [vmem:[#allocation5 + $0x1d0] sm:$0xff]
    %v186 = vld [vmem:[#allocation5 + $0x1d8] sm:$0xff]
    %v187 = vld [vmem:[#allocation5 + $0x1e0] sm:$0xff]
    %v188 = vld [vmem:[#allocation5 + $0x1e8] sm:$0xff]
    %v189 = vld [vmem:[#allocation5 + $0x1f0] sm:$0xff]
    %v190 = vld [vmem:[#allocation5 + $0x1f8] sm:$0xff]
    %v191 = vld [vmem:[#allocation5 + $0x200] sm:$0xff]
    %v192 = vld [vmem:[#allocation5 + $0x208] sm:$0xff]
    %v193 = vld [vmem:[#allocation5 + $0x210] sm:$0xff]
    %v194 = vld [vmem:[#allocation5 + $0x218] sm:$0xff]
    %v195 = vld [vmem:[#allocation5 + $0x220] sm:$0xff]
    %v196 = vld [vmem:[#allocation5 + $0x228] sm:$0xff]
    %v197 = vld [vmem:[#allocation5 + $0x230] sm:$0xff]
    %v198 = vld [vmem:[#allocation5 + $0x238] sm:$0xff]
    %v199 = vld [vmem:[#allocation5 + $0x240] sm:$0xff]
    %v200 = vld [vmem:[#allocation5 + $0x248] sm:$0xff]
    %v201 = vld [vmem:[#allocation5 + $0x250] sm:$0xff]
    %v202 = vld [vmem:[#allocation5 + $0x258] sm:$0xff]
    %v203 = vld [vmem:[#allocation5 + $0x260] sm:$0xff]
    %v204 = vld [vmem:[#allocation5 + $0x268] sm:$0xff]
    %v205 = vld [vmem:[#allocation5 + $0x270] sm:$0xff]
    %v206 = vld [vmem:[#allocation5 + $0x278] sm:$0xff]
    %v207 = vld [vmem:[#allocation5 + $0x280] sm:$0xff]
    %v208 = vld [vmem:[#allocation5 + $0x288] sm:$0xff]
    %v209 = vld [vmem:[#allocation5 + $0x290] sm:$0xff]
    %v210 = vld [vmem:[#allocation5 + $0x298] sm:$0xff]
    %v211 = vld [vmem:[#allocation5 + $0x2a0] sm:$0xff]
    %v212 = vld [vmem:[#allocation5 + $0x2a8] sm:$0xff]
    %v213 = vld [vmem:[#allocation5 + $0x2b0] sm:$0xff]
    %v214 = vld [vmem:[#allocation5 + $0x2b8] sm:$0xff]
    %v215 = vld [vmem:[#allocation5 + $0x2c0] sm:$0xff]
    %v216 = vld [vmem:[#allocation5 + $0x2c8] sm:$0xff]
    %v217 = vld [vmem:[#allocation5 + $0x2d0] sm:$0xff]
    %v218 = vld [vmem:[#allocation5 + $0x2d8] sm:$0xff]
    %v219 = vld [vmem:[#allocation5 + $0x2e0] sm:$0xff]
    %v220 = vld [vmem:[#allocation5 + $0x2e8] sm:$0xff]
    %v221 = vld [vmem:[#allocation5 + $0x2f0] sm:$0xff]
    %v222 = vld [vmem:[#allocation5 + $0x2f8] sm:$0xff]
    %v223 = vld [vmem:[#allocation5 + $0x300] sm:$0xff]
    %v224 = vld [vmem:[#allocation5 + $0x308] sm:$0xff]
    %v225 = vld [vmem:[#allocation5 + $0x310] sm:$0xff]
    %v226 = vld [vmem:[#allocation5 + $0x318] sm:$0xff]
    %v227 = vld [vmem:[#allocation5 + $0x320] sm:$0xff]
    %v228 = vld [vmem:[#allocation5 + $0x328] sm:$0xff]
    %v229 = vld [vmem:[#allocation5 + $0x330] sm:$0xff]
    %v230 = vld [vmem:[#allocation5 + $0x338] sm:$0xff]
    %v231 = vld [vmem:[#allocation5 + $0x340] sm:$0xff]
    %v232 = vld [vmem:[#allocation5 + $0x348] sm:$0xff]
    %v233 = vld [vmem:[#allocation5 + $0x350] sm:$0xff]
    %v234 = vld [vmem:[#allocation5 + $0x358] sm:$0xff]
    %v235 = vld [vmem:[#allocation5 + $0x360] sm:$0xff]
    %v236 = vld [vmem:[#allocation5 + $0x368] sm:$0xff]
    %v237 = vld [vmem:[#allocation5 + $0x370] sm:$0xff]
    %v238 = vld [vmem:[#allocation5 + $0x378] sm:$0xff]
    %v239 = vld [vmem:[#allocation5 + $0x380] sm:$0xff]
    %v240 = vld [vmem:[#allocation5 + $0x388] sm:$0xff]
    %v241 = vld [vmem:[#allocation5 + $0x390] sm:$0xff]
    %v242 = vld [vmem:[#allocation5 + $0x398] sm:$0xff]
    %v243 = vld [vmem:[#allocation5 + $0x3a0] sm:$0xff]
    %v244 = vld [vmem:[#allocation5 + $0x3a8] sm:$0xff]
    %v245 = vld [vmem:[#allocation5 + $0x3b0] sm:$0xff]
    %v246 = vld [vmem:[#allocation5 + $0x3b8] sm:$0xff]
    %v247 = vld [vmem:[#allocation5 + $0x3c0] sm:$0xff]
    %v248 = vld [vmem:[#allocation5 + $0x3c8] sm:$0xff]
    %v249 = vld [vmem:[#allocation5 + $0x3d0] sm:$0xff]
    %v250 = vld [vmem:[#allocation5 + $0x3d8] sm:$0xff]
    %v251 = vld [vmem:[#allocation5 + $0x3e0] sm:$0xff]
    %v252 = vld [vmem:[#allocation5 + $0x3e8] sm:$0xff]
    %v253 = vld [vmem:[#allocation5 + $0x3f0] sm:$0xff]
    %v254 = vld [vmem:[#allocation5 + $0x3f8] sm:$0xff]
    %v255 = vld [vmem:[#allocation5 + $0x400] sm:$0xff]
    %v256 = vld [vmem:[#allocation5 + $0x408] sm:$0xff]
    %v257 = vld [vmem:[#allocation5 + $0x410] sm:$0xff]
    %v258 = vld [vmem:[#allocation5 + $0x418] sm:$0xff]
    %v259 = vld [vmem:[#allocation5 + $0x420] sm:$0xff]
    %v260 = vld [vmem:[#allocation5 + $0x428] sm:$0xff]
    %v261 = vld [vmem:[#allocation5 + $0x430] sm:$0xff]
    %v262 = vld [vmem:[#allocation5 + $0x438] sm:$0xff]
    %v263 = vld [vmem:[#allocation5 + $0x440] sm:$0xff]
    %v264 = vld [vmem:[#allocation5 + $0x448] sm:$0xff]
    %v265 = vld [vmem:[#allocation5 + $0x450] sm:$0xff]
    %v266 = vld [vmem:[#allocation5 + $0x458] sm:$0xff]
    %v267 = vld [vmem:[#allocation5 + $0x460] sm:$0xff]
    %v268 = vld [vmem:[#allocation5 + $0x468] sm:$0xff]
    %v269 = vld [vmem:[#allocation5 + $0x470] sm:$0xff]
    %v270 = vld [vmem:[#allocation5 + $0x478] sm:$0xff]
    %v271 = vld [vmem:[#allocation5 + $0x480] sm:$0xff]
    %v272 = vld [vmem:[#allocation5 + $0x488] sm:$0xff]
    %v273 = vld [vmem:[#allocation5 + $0x490] sm:$0xff]
    %v274 = vld [vmem:[#allocation5 + $0x498] sm:$0xff]
    %v275 = vld [vmem:[#allocation5 + $0x4a0] sm:$0xff]
    %v276 = vld [vmem:[#allocation5 + $0x4a8] sm:$0xff]
    %v277 = vld [vmem:[#allocation5 + $0x4b0] sm:$0xff]
    %v278 = vld [vmem:[#allocation5 + $0x4b8] sm:$0xff]
    %v279 = vld [vmem:[#allocation5 + $0x4c0] sm:$0xff]
    %v280 = vld [vmem:[#allocation5 + $0x4c8] sm:$0xff]
    %v281 = vld [vmem:[#allocation5 + $0x4d0] sm:$0xff]
    %v282 = vld [vmem:[#allocation5 + $0x4d8] sm:$0xff]
    %v283 = vld [vmem:[#allocation5 + $0x4e0] sm:$0xff]
    %v284 = vld [vmem:[#allocation5 + $0x4e8] sm:$0xff]
    %v285 = vld [vmem:[#allocation5 + $0x4f0] sm:$0xff]
    %v286 = vld [vmem:[#allocation5 + $0x4f8] sm:$0xff]
    %v287 = vld [vmem:[#allocation5 + $0x500] sm:$0xff]
    %v288 = vld [vmem:[#allocation5 + $0x508] sm:$0xff]
    %v289 = vld [vmem:[#allocation5 + $0x510] sm:$0xff]
    %v290 = vld [vmem:[#allocation5 + $0x518] sm:$0xff]
    %v291 = vld [vmem:[#allocation5 + $0x520] sm:$0xff]
    %v292 = vld [vmem:[#allocation5 + $0x528] sm:$0xff]
    %v293 = vld [vmem:[#allocation5 + $0x530] sm:$0xff]
    %v294 = vld [vmem:[#allocation5 + $0x538] sm:$0xff]
    %v295 = vld [vmem:[#allocation5 + $0x540] sm:$0xff]
    %v296 = vld [vmem:[#allocation5 + $0x548] sm:$0xff]
    %v297 = vld [vmem:[#allocation5 + $0x550] sm:$0xff]
    %v298 = vld [vmem:[#allocation5 + $0x558] sm:$0xff]
    %v299 = vld [vmem:[#allocation5 + $0x560] sm:$0xff]
    %v300 = vld [vmem:[#allocation5 + $0x568] sm:$0xff]
    %v301 = vld [vmem:[#allocation5 + $0x570] sm:$0xff]
    %v302 = vld [vmem:[#allocation5 + $0x578] sm:$0xff]
    %v303 = vld [vmem:[#allocation5 + $0x580] sm:$0xff]
    %v304 = vld [vmem:[#allocation5 + $0x588] sm:$0xff]
    %v305 = vld [vmem:[#allocation5 + $0x590] sm:$0xff]
    %v306 = vld [vmem:[#allocation5 + $0x598] sm:$0xff]
    %v307 = vld [vmem:[#allocation5 + $0x5a0] sm:$0xff]
    %v308 = vld [vmem:[#allocation5 + $0x5a8] sm:$0xff]
    %v309 = vld [vmem:[#allocation5 + $0x5b0] sm:$0xff]
    %v310 = vld [vmem:[#allocation5 + $0x5b8] sm:$0xff]
    %v311 = vld [vmem:[#allocation5 + $0x5c0] sm:$0xff]
    %v312 = vld [vmem:[#allocation5 + $0x5c8] sm:$0xff]
    %v313 = vld [vmem:[#allocation5 + $0x5d0] sm:$0xff]
    %v314 = vld [vmem:[#allocation5 + $0x5d8] sm:$0xff]
    %v315 = vld [vmem:[#allocation5 + $0x5e0] sm:$0xff]
    %v316 = vld [vmem:[#allocation5 + $0x5e8] sm:$0xff]
    %v317 = vld [vmem:[#allocation5 + $0x5f0] sm:$0xff]
    %v318 = vld [vmem:[#allocation5 + $0x5f8] sm:$0xff]
    %v319 = vld [vmem:[#allocation5 + $0x600] sm:$0xff]
    %v320 = vld [vmem:[#allocation5 + $0x608] sm:$0xff]
    %v321 = vld [vmem:[#allocation5 + $0x610] sm:$0xff]
    %v322 = vld [vmem:[#allocation5 + $0x618] sm:$0xff]
    %v324 = vlaneseq
    %v325 = vshrl.u32 %v324, 7
    %v326 = vsub.s32 0, %v325
    %v327 = vrot.slane %v126, %v326
    %v328 = vlaneseq
    %v329 = vshrl.u32 %v328, 7
    %v330 = vsub.s32 1, %v329
    %v331 = vrot.slane %v126, %v330
    %v332 = vlaneseq
    %v333 = vshrl.u32 %v332, 7
    %v334 = vsub.s32 2, %v333
    %v335 = vrot.slane %v126, %v334
    %v336 = vlaneseq
    %v337 = vshrl.u32 %v336, 7
    %v338 = vsub.s32 3, %v337
    %v339 = vrot.slane %v126, %v338
    %v540 = vunpack.c.l.b16 %v127
    %v541 = vunpack.c.h.b16 %v127
    %v542 = vunpack.c.l.b16 %v128
    %v543 = vunpack.c.h.b16 %v128
    %v544 = vunpack.c.l.b16 %v129
    %v545 = vunpack.c.h.b16 %v129
    %v546 = vunpack.c.l.b16 %v130
    %v547 = vunpack.c.h.b16 %v130
    %v548 = vunpack.c.l.b16 %v131
    %v549 = vunpack.c.h.b16 %v131
    %v550 = vunpack.c.l.b16 %v132
    %v551 = vunpack.c.h.b16 %v132
    %v552 = vunpack.c.l.b16 %v133
    %v553 = vunpack.c.h.b16 %v133
    %v554 = vunpack.c.l.b16 %v134
    %v555 = vunpack.c.h.b16 %v134
    %v556 = vunpack.c.l.b16 %v135
    %v557 = vunpack.c.h.b16 %v135
    %v558 = vunpack.c.l.b16 %v136
    %v559 = vunpack.c.h.b16 %v136
    %v560 = vunpack.c.l.b16 %v137
    %v561 = vunpack.c.h.b16 %v137
    %v562 = vunpack.c.l.b16 %v138
    %v563 = vunpack.c.h.b16 %v138
    %v564 = vunpack.c.l.b16 %v139
    %v565 = vunpack.c.h.b16 %v139
    %v566 = vunpack.c.l.b16 %v140
    %v567 = vunpack.c.h.b16 %v140
    %v568 = vunpack.c.l.b16 %v141
    %v569 = vunpack.c.h.b16 %v141
    %v570 = vunpack.c.l.b16 %v142
    %v571 = vunpack.c.h.b16 %v142
    %v572 = vunpack.c.l.b16 %v143
    %v573 = vunpack.c.h.b16 %v143
    %v574 = vunpack.c.l.b16 %v144
    %v575 = vunpack.c.h.b16 %v144
    %v576 = vunpack.c.l.b16 %v145
    %v577 = vunpack.c.h.b16 %v145
    %v578 = vunpack.c.l.b16 %v146
    %v579 = vunpack.c.h.b16 %v146
    %v580 = vunpack.c.l.b16 %v147
    %v581 = vunpack.c.h.b16 %v147
    %v582 = vunpack.c.l.b16 %v148
    %v583 = vunpack.c.h.b16 %v148
    %v584 = vunpack.c.l.b16 %v149
    %v585 = vunpack.c.h.b16 %v149
    %v586 = vunpack.c.l.b16 %v150
    %v587 = vunpack.c.h.b16 %v150
    %v588 = vunpack.c.l.b16 %v151
    %v589 = vunpack.c.h.b16 %v151
    %v590 = vunpack.c.l.b16 %v152
    %v591 = vunpack.c.h.b16 %v152
    %v592 = vunpack.c.l.b16 %v153
    %v593 = vunpack.c.h.b16 %v153
    %v594 = vunpack.c.l.b16 %v154
    %v595 = vunpack.c.h.b16 %v154
    %v596 = vunpack.c.l.b16 %v155
    %v597 = vunpack.c.h.b16 %v155
    %v598 = vunpack.c.l.b16 %v156
    %v599 = vunpack.c.h.b16 %v156
    %v600 = vunpack.c.l.b16 %v157
    %v601 = vunpack.c.h.b16 %v157
    %v602 = vunpack.c.l.b16 %v158
    %v603 = vunpack.c.h.b16 %v158
    %v604 = vunpack.c.l.b16 %v159
    %v605 = vunpack.c.h.b16 %v159
    %v606 = vunpack.c.l.b16 %v160
    %v607 = vunpack.c.h.b16 %v160
    %v608 = vunpack.c.l.b16 %v161
    %v609 = vunpack.c.h.b16 %v161
    %v610 = vunpack.c.l.b16 %v162
    %v611 = vunpack.c.h.b16 %v162
    %v612 = vunpack.c.l.b16 %v163
    %v613 = vunpack.c.h.b16 %v163
    %v614 = vunpack.c.l.b16 %v164
    %v615 = vunpack.c.h.b16 %v164
    %v616 = vunpack.c.l.b16 %v165
    %v617 = vunpack.c.h.b16 %v165
    %v618 = vunpack.c.l.b16 %v166
    %v619 = vunpack.c.h.b16 %v166
    %v620 = vunpack.c.l.b16 %v167
    %v621 = vunpack.c.h.b16 %v167
    %v622 = vunpack.c.l.b16 %v168
    %v623 = vunpack.c.h.b16 %v168
    %v624 = vunpack.c.l.b16 %v169
    %v625 = vunpack.c.h.b16 %v169
    %v626 = vunpack.c.l.b16 %v170
    %v627 = vunpack.c.h.b16 %v170
    %v628 = vunpack.c.l.b16 %v171
    %v629 = vunpack.c.h.b16 %v171
    %v630 = vunpack.c.l.b16 %v172
    %v631 = vunpack.c.h.b16 %v172
    %v632 = vunpack.c.l.b16 %v173
    %v633 = vunpack.c.h.b16 %v173
    %v634 = vunpack.c.l.b16 %v174
    %v635 = vunpack.c.h.b16 %v174
    %v636 = vunpack.c.l.b16 %v175
    %v637 = vunpack.c.h.b16 %v175
    %v638 = vunpack.c.l.b16 %v176
    %v639 = vunpack.c.h.b16 %v176
    %v640 = vunpack.c.l.b16 %v177
    %v641 = vunpack.c.h.b16 %v177
    %v642 = vunpack.c.l.b16 %v178
    %v643 = vunpack.c.h.b16 %v178
    %v644 = vunpack.c.l.b16 %v179
    %v645 = vunpack.c.h.b16 %v179
    %v646 = vunpack.c.l.b16 %v180
    %v647 = vunpack.c.h.b16 %v180
    %v648 = vunpack.c.l.b16 %v181
    %v649 = vunpack.c.h.b16 %v181
    %v650 = vunpack.c.l.b16 %v182
    %v651 = vunpack.c.h.b16 %v182
    %v652 = vunpack.c.l.b16 %v183
    %v653 = vunpack.c.h.b16 %v183
    %v654 = vunpack.c.l.b16 %v184
    %v655 = vunpack.c.h.b16 %v184
    %v656 = vunpack.c.l.b16 %v185
    %v657 = vunpack.c.h.b16 %v185
    %v658 = vunpack.c.l.b16 %v186
    %v659 = vunpack.c.h.b16 %v186
    %v660 = vunpack.c.l.b16 %v187
    %v661 = vunpack.c.h.b16 %v187
    %v662 = vunpack.c.l.b16 %v188
    %v663 = vunpack.c.h.b16 %v188
    %v664 = vunpack.c.l.b16 %v189
    %v665 = vunpack.c.h.b16 %v189
    %v666 = vunpack.c.l.b16 %v190
    %v667 = vunpack.c.h.b16 %v190
    %v668 = vunpack.c.l.b16 %v191
    %v669 = vunpack.c.h.b16 %v191
    %v670 = vunpack.c.l.b16 %v192
    %v671 = vunpack.c.h.b16 %v192
    %v672 = vunpack.c.l.b16 %v193
    %v673 = vunpack.c.h.b16 %v193
    %v674 = vunpack.c.l.b16 %v194
    %v675 = vunpack.c.h.b16 %v194
    %v676 = vunpack.c.l.b16 %v195
    %v677 = vunpack.c.h.b16 %v195
    %v678 = vunpack.c.l.b16 %v196
    %v679 = vunpack.c.h.b16 %v196
    %v680 = vunpack.c.l.b16 %v197
    %v681 = vunpack.c.h.b16 %v197
    %v682 = vunpack.c.l.b16 %v198
    %v683 = vunpack.c.h.b16 %v198
    %v684 = vunpack.c.l.b16 %v199
    %v685 = vunpack.c.h.b16 %v199
    %v686 = vunpack.c.l.b16 %v200
    %v687 = vunpack.c.h.b16 %v200
    %v688 = vunpack.c.l.b16 %v201
    %v689 = vunpack.c.h.b16 %v201
    %v690 = vunpack.c.l.b16 %v202
    %v691 = vunpack.c.h.b16 %v202
    %v692 = vunpack.c.l.b16 %v203
    %v693 = vunpack.c.h.b16 %v203
    %v694 = vunpack.c.l.b16 %v204
    %v695 = vunpack.c.h.b16 %v204
    %v696 = vunpack.c.l.b16 %v205
    %v697 = vunpack.c.h.b16 %v205
    %v698 = vunpack.c.l.b16 %v206
    %v699 = vunpack.c.h.b16 %v206
    %v700 = vunpack.c.l.b16 %v207
    %v701 = vunpack.c.h.b16 %v207
    %v702 = vunpack.c.l.b16 %v208
    %v703 = vunpack.c.h.b16 %v208
    %v704 = vunpack.c.l.b16 %v209
    %v705 = vunpack.c.h.b16 %v209
    %v706 = vunpack.c.l.b16 %v210
    %v707 = vunpack.c.h.b16 %v210
    %v708 = vunpack.c.l.b16 %v211
    %v709 = vunpack.c.h.b16 %v211
    %v710 = vunpack.c.l.b16 %v212
    %v711 = vunpack.c.h.b16 %v212
    %v712 = vunpack.c.l.b16 %v213
    %v713 = vunpack.c.h.b16 %v213
    %v714 = vunpack.c.l.b16 %v214
    %v715 = vunpack.c.h.b16 %v214
    %v716 = vunpack.c.l.b16 %v215
    %v717 = vunpack.c.h.b16 %v215
    %v718 = vunpack.c.l.b16 %v216
    %v719 = vunpack.c.h.b16 %v216
    %v720 = vunpack.c.l.b16 %v217
    %v721 = vunpack.c.h.b16 %v217
    %v722 = vunpack.c.l.b16 %v218
    %v723 = vunpack.c.h.b16 %v218
    %v724 = vunpack.c.l.b16 %v219
    %v725 = vunpack.c.h.b16 %v219
    %v726 = vunpack.c.l.b16 %v220
    %v727 = vunpack.c.h.b16 %v220
    %v728 = vunpack.c.l.b16 %v221
    %v729 = vunpack.c.h.b16 %v221
    %v730 = vunpack.c.l.b16 %v222
    %v731 = vunpack.c.h.b16 %v222
    %v732 = vunpack.c.l.b16 %v223
    %v733 = vunpack.c.h.b16 %v223
    %v734 = vunpack.c.l.b16 %v224
    %v735 = vunpack.c.h.b16 %v224
    %v736 = vunpack.c.l.b16 %v225
    %v737 = vunpack.c.h.b16 %v225
    %v738 = vunpack.c.l.b16 %v226
    %v739 = vunpack.c.h.b16 %v226
    %v740 = vunpack.c.l.b16 %v227
    %v741 = vunpack.c.h.b16 %v227
    %v742 = vunpack.c.l.b16 %v228
    %v743 = vunpack.c.h.b16 %v228
    %v744 = vunpack.c.l.b16 %v229
    %v745 = vunpack.c.h.b16 %v229
    %v746 = vunpack.c.l.b16 %v230
    %v747 = vunpack.c.h.b16 %v230
    %v748 = vunpack.c.l.b16 %v231
    %v749 = vunpack.c.h.b16 %v231
    %v750 = vunpack.c.l.b16 %v232
    %v751 = vunpack.c.h.b16 %v232
    %v752 = vunpack.c.l.b16 %v233
    %v753 = vunpack.c.h.b16 %v233
    %v754 = vunpack.c.l.b16 %v234
    %v755 = vunpack.c.h.b16 %v234
    %v756 = vunpack.c.l.b16 %v235
    %v757 = vunpack.c.h.b16 %v235
    %v758 = vunpack.c.l.b16 %v236
    %v759 = vunpack.c.h.b16 %v236
    %v760 = vunpack.c.l.b16 %v237
    %v761 = vunpack.c.h.b16 %v237
    %v762 = vunpack.c.l.b16 %v238
    %v763 = vunpack.c.h.b16 %v238
    %v764 = vunpack.c.l.b16 %v239
    %v765 = vunpack.c.h.b16 %v239
    %v766 = vunpack.c.l.b16 %v240
    %v767 = vunpack.c.h.b16 %v240
    %v768 = vunpack.c.l.b16 %v241
    %v769 = vunpack.c.h.b16 %v241
    %v770 = vunpack.c.l.b16 %v242
    %v771 = vunpack.c.h.b16 %v242
    %v772 = vunpack.c.l.b16 %v243
    %v773 = vunpack.c.h.b16 %v243
    %v774 = vunpack.c.l.b16 %v244
    %v775 = vunpack.c.h.b16 %v244
    %v776 = vunpack.c.l.b16 %v245
    %v777 = vunpack.c.h.b16 %v245
    %v778 = vunpack.c.l.b16 %v246
    %v779 = vunpack.c.h.b16 %v246
    %v780 = vunpack.c.l.b16 %v247
    %v781 = vunpack.c.h.b16 %v247
    %v782 = vunpack.c.l.b16 %v248
    %v783 = vunpack.c.h.b16 %v248
    %v784 = vunpack.c.l.b16 %v249
    %v785 = vunpack.c.h.b16 %v249
    %v786 = vunpack.c.l.b16 %v250
    %v787 = vunpack.c.h.b16 %v250
    %v788 = vunpack.c.l.b16 %v251
    %v789 = vunpack.c.h.b16 %v251
    %v790 = vunpack.c.l.b16 %v252
    %v791 = vunpack.c.h.b16 %v252
    %v792 = vunpack.c.l.b16 %v253
    %v793 = vunpack.c.h.b16 %v253
    %v794 = vunpack.c.l.b16 %v254
    %v795 = vunpack.c.h.b16 %v254
    %v796 = vunpack.c.l.b16 %v255
    %v797 = vunpack.c.h.b16 %v255
    %v798 = vunpack.c.l.b16 %v256
    %v799 = vunpack.c.h.b16 %v256
    %v800 = vunpack.c.l.b16 %v257
    %v801 = vunpack.c.h.b16 %v257
    %v802 = vunpack.c.l.b16 %v258
    %v803 = vunpack.c.h.b16 %v258
    %v804 = vunpack.c.l.b16 %v259
    %v805 = vunpack.c.h.b16 %v259
    %v806 = vunpack.c.l.b16 %v260
    %v807 = vunpack.c.h.b16 %v260
    %v808 = vunpack.c.l.b16 %v261
    %v809 = vunpack.c.h.b16 %v261
    %v810 = vunpack.c.l.b16 %v262
    %v811 = vunpack.c.h.b16 %v262
    %v812 = vunpack.c.l.b16 %v263
    %v813 = vunpack.c.h.b16 %v263
    %v814 = vunpack.c.l.b16 %v264
    %v815 = vunpack.c.h.b16 %v264
    %v816 = vunpack.c.l.b16 %v265
    %v817 = vunpack.c.h.b16 %v265
    %v818 = vunpack.c.l.b16 %v266
    %v819 = vunpack.c.h.b16 %v266
    %v820 = vunpack.c.l.b16 %v267
    %v821 = vunpack.c.h.b16 %v267
    %v822 = vunpack.c.l.b16 %v268
    %v823 = vunpack.c.h.b16 %v268
    %v824 = vunpack.c.l.b16 %v269
    %v825 = vunpack.c.h.b16 %v269
    %v826 = vunpack.c.l.b16 %v270
    %v827 = vunpack.c.h.b16 %v270
    %v828 = vunpack.c.l.b16 %v271
    %v829 = vunpack.c.h.b16 %v271
    %v830 = vunpack.c.l.b16 %v272
    %v831 = vunpack.c.h.b16 %v272
    %v832 = vunpack.c.l.b16 %v273
    %v833 = vunpack.c.h.b16 %v273
    %v834 = vunpack.c.l.b16 %v274
    %v835 = vunpack.c.h.b16 %v274
    %v836 = vunpack.c.l.b16 %v275
    %v837 = vunpack.c.h.b16 %v275
    %v838 = vunpack.c.l.b16 %v276
    %v839 = vunpack.c.h.b16 %v276
    %v840 = vunpack.c.l.b16 %v277
    %v841 = vunpack.c.h.b16 %v277
    %v842 = vunpack.c.l.b16 %v278
    %v843 = vunpack.c.h.b16 %v278
    %v844 = vunpack.c.l.b16 %v279
    %v845 = vunpack.c.h.b16 %v279
    %v846 = vunpack.c.l.b16 %v280
    %v847 = vunpack.c.h.b16 %v280
    %v848 = vunpack.c.l.b16 %v281
    %v849 = vunpack.c.h.b16 %v281
    %v850 = vunpack.c.l.b16 %v282
    %v851 = vunpack.c.h.b16 %v282
    %v852 = vunpack.c.l.b16 %v283
    %v853 = vunpack.c.h.b16 %v283
    %v854 = vunpack.c.l.b16 %v284
    %v855 = vunpack.c.h.b16 %v284
    %v856 = vunpack.c.l.b16 %v285
    %v857 = vunpack.c.h.b16 %v285
    %v858 = vunpack.c.l.b16 %v286
    %v859 = vunpack.c.h.b16 %v286
    %v860 = vunpack.c.l.b16 %v287
    %v861 = vunpack.c.h.b16 %v287
    %v862 = vunpack.c.l.b16 %v288
    %v863 = vunpack.c.h.b16 %v288
    %v864 = vunpack.c.l.b16 %v289
    %v865 = vunpack.c.h.b16 %v289
    %v866 = vunpack.c.l.b16 %v290
    %v867 = vunpack.c.h.b16 %v290
    %v868 = vunpack.c.l.b16 %v291
    %v869 = vunpack.c.h.b16 %v291
    %v870 = vunpack.c.l.b16 %v292
    %v871 = vunpack.c.h.b16 %v292
    %v872 = vunpack.c.l.b16 %v293
    %v873 = vunpack.c.h.b16 %v293
    %v874 = vunpack.c.l.b16 %v294
    %v875 = vunpack.c.h.b16 %v294
    %v876 = vunpack.c.l.b16 %v295
    %v877 = vunpack.c.h.b16 %v295
    %v878 = vunpack.c.l.b16 %v296
    %v879 = vunpack.c.h.b16 %v296
    %v880 = vunpack.c.l.b16 %v297
    %v881 = vunpack.c.h.b16 %v297
    %v882 = vunpack.c.l.b16 %v298
    %v883 = vunpack.c.h.b16 %v298
    %v884 = vunpack.c.l.b16 %v299
    %v885 = vunpack.c.h.b16 %v299
    %v886 = vunpack.c.l.b16 %v300
    %v887 = vunpack.c.h.b16 %v300
    %v888 = vunpack.c.l.b16 %v301
    %v889 = vunpack.c.h.b16 %v301
    %v890 = vunpack.c.l.b16 %v302
    %v891 = vunpack.c.h.b16 %v302
    %v892 = vunpack.c.l.b16 %v303
    %v893 = vunpack.c.h.b16 %v303
    %v894 = vunpack.c.l.b16 %v304
    %v895 = vunpack.c.h.b16 %v304
    %v896 = vunpack.c.l.b16 %v305
    %v897 = vunpack.c.h.b16 %v305
    %v898 = vunpack.c.l.b16 %v306
    %v899 = vunpack.c.h.b16 %v306
    %v900 = vunpack.c.l.b16 %v307
    %v901 = vunpack.c.h.b16 %v307
    %v902 = vunpack.c.l.b16 %v308
    %v903 = vunpack.c.h.b16 %v308
    %v904 = vunpack.c.l.b16 %v309
    %v905 = vunpack.c.h.b16 %v309
    %v906 = vunpack.c.l.b16 %v310
    %v907 = vunpack.c.h.b16 %v310
    %v908 = vunpack.c.l.b16 %v311
    %v909 = vunpack.c.h.b16 %v311
    %v910 = vunpack.c.l.b16 %v312
    %v911 = vunpack.c.h.b16 %v312
    %v912 = vunpack.c.l.b16 %v313
    %v913 = vunpack.c.h.b16 %v313
    %v914 = vunpack.c.l.b16 %v314
    %v915 = vunpack.c.h.b16 %v314
    %v916 = vunpack.c.l.b16 %v315
    %v917 = vunpack.c.h.b16 %v315
    %v918 = vunpack.c.l.b16 %v316
    %v919 = vunpack.c.h.b16 %v316
    %v920 = vunpack.c.l.b16 %v317
    %v921 = vunpack.c.h.b16 %v317
    %v922 = vunpack.c.l.b16 %v318
    %v923 = vunpack.c.h.b16 %v318
    %v924 = vunpack.c.l.b16 %v319
    %v925 = vunpack.c.h.b16 %v319
    %v926 = vunpack.c.l.b16 %v320
    %v927 = vunpack.c.h.b16 %v320
    %v928 = vunpack.c.l.b16 %v321
    %v929 = vunpack.c.h.b16 %v321
    %v930 = vunpack.c.l.b16 %v322
    %v931 = vunpack.c.h.b16 %v322
    %v932 = vpack.c.b16 %v544, %v540
    %v933 = vpack.c.b16 %v545, %v541
    %v934 = vpack.c.b16 %v546, %v542
    %v935 = vpack.c.b16 %v547, %v543
    %v936 = vpack.c.b16 %v552, %v548
    %v937 = vpack.c.b16 %v553, %v549
    %v938 = vpack.c.b16 %v554, %v550
    %v939 = vpack.c.b16 %v555, %v551
    %v940 = vpack.c.b16 %v560, %v556
    %v941 = vpack.c.b16 %v561, %v557
    %v942 = vpack.c.b16 %v562, %v558
    %v943 = vpack.c.b16 %v563, %v559
    %v944 = vpack.c.b16 %v568, %v564
    %v945 = vpack.c.b16 %v569, %v565
    %v946 = vpack.c.b16 %v570, %v566
    %v947 = vpack.c.b16 %v571, %v567
    %v948 = vpack.c.b16 %v576, %v572
    %v949 = vpack.c.b16 %v577, %v573
    %v950 = vpack.c.b16 %v578, %v574
    %v951 = vpack.c.b16 %v579, %v575
    %v952 = vpack.c.b16 %v584, %v580
    %v953 = vpack.c.b16 %v585, %v581
    %v954 = vpack.c.b16 %v586, %v582
    %v955 = vpack.c.b16 %v587, %v583
    %v956 = vpack.c.b16 %v592, %v588
    %v957 = vpack.c.b16 %v593, %v589
    %v958 = vpack.c.b16 %v594, %v590
    %v959 = vpack.c.b16 %v595, %v591
    %v960 = vpack.c.b16 %v600, %v596
    %v961 = vpack.c.b16 %v601, %v597
    %v962 = vpack.c.b16 %v602, %v598
    %v963 = vpack.c.b16 %v603, %v599
    %v964 = vpack.c.b16 %v608, %v604
    %v965 = vpack.c.b16 %v609, %v605
    %v966 = vpack.c.b16 %v610, %v606
    %v967 = vpack.c.b16 %v611, %v607
    %v968 = vpack.c.b16 %v616, %v612
    %v969 = vpack.c.b16 %v617, %v613
    %v970 = vpack.c.b16 %v618, %v614
    %v971 = vpack.c.b16 %v619, %v615
    %v972 = vpack.c.b16 %v624, %v620
    %v973 = vpack.c.b16 %v625, %v621
    %v974 = vpack.c.b16 %v626, %v622
    %v975 = vpack.c.b16 %v627, %v623
    %v976 = vpack.c.b16 %v632, %v628
    %v977 = vpack.c.b16 %v633, %v629
    %v978 = vpack.c.b16 %v634, %v630
    %v979 = vpack.c.b16 %v635, %v631
    %v980 = vpack.c.b16 %v640, %v636
    %v981 = vpack.c.b16 %v641, %v637
    %v982 = vpack.c.b16 %v642, %v638
    %v983 = vpack.c.b16 %v643, %v639
    %v984 = vpack.c.b16 %v648, %v644
    %v985 = vpack.c.b16 %v649, %v645
    %v986 = vpack.c.b16 %v650, %v646
    %v987 = vpack.c.b16 %v651, %v647
    %v988 = vpack.c.b16 %v656, %v652
    %v989 = vpack.c.b16 %v657, %v653
    %v990 = vpack.c.b16 %v658, %v654
    %v991 = vpack.c.b16 %v659, %v655
    %v992 = vpack.c.b16 %v664, %v660
    %v993 = vpack.c.b16 %v665, %v661
    %v994 = vpack.c.b16 %v666, %v662
    %v995 = vpack.c.b16 %v667, %v663
    %v996 = vpack.c.b16 %v672, %v668
    %v997 = vpack.c.b16 %v673, %v669
    %v998 = vpack.c.b16 %v674, %v670
    %v999 = vpack.c.b16 %v675, %v671
    %v1000 = vpack.c.b16 %v680, %v676
    %v1001 = vpack.c.b16 %v681, %v677
    %v1002 = vpack.c.b16 %v682, %v678
    %v1003 = vpack.c.b16 %v683, %v679
    %v1004 = vpack.c.b16 %v688, %v684
    %v1005 = vpack.c.b16 %v689, %v685
    %v1006 = vpack.c.b16 %v690, %v686
    %v1007 = vpack.c.b16 %v691, %v687
    %v1008 = vpack.c.b16 %v696, %v692
    %v1009 = vpack.c.b16 %v697, %v693
    %v1010 = vpack.c.b16 %v698, %v694
    %v1011 = vpack.c.b16 %v699, %v695
    %v1012 = vpack.c.b16 %v704, %v700
    %v1013 = vpack.c.b16 %v705, %v701
    %v1014 = vpack.c.b16 %v706, %v702
    %v1015 = vpack.c.b16 %v707, %v703
    %v1016 = vpack.c.b16 %v712, %v708
    %v1017 = vpack.c.b16 %v713, %v709
    %v1018 = vpack.c.b16 %v714, %v710
    %v1019 = vpack.c.b16 %v715, %v711
    %v1020 = vpack.c.b16 %v720, %v716
    %v1021 = vpack.c.b16 %v721, %v717
    %v1022 = vpack.c.b16 %v722, %v718
    %v1023 = vpack.c.b16 %v723, %v719
    %v1024 = vpack.c.b16 %v728, %v724
    %v1025 = vpack.c.b16 %v729, %v725
    %v1026 = vpack.c.b16 %v730, %v726
    %v1027 = vpack.c.b16 %v731, %v727
    %v1028 = vpack.c.b16 %v736, %v732
    %v1029 = vpack.c.b16 %v737, %v733
    %v1030 = vpack.c.b16 %v738, %v734
    %v1031 = vpack.c.b16 %v739, %v735
    %v1032 = vpack.c.b16 %v744, %v740
    %v1033 = vpack.c.b16 %v745, %v741
    %v1034 = vpack.c.b16 %v746, %v742
    %v1035 = vpack.c.b16 %v747, %v743
    %v1036 = vpack.c.b16 %v752, %v748
    %v1037 = vpack.c.b16 %v753, %v749
    %v1038 = vpack.c.b16 %v754, %v750
    %v1039 = vpack.c.b16 %v755, %v751
    %v1040 = vpack.c.b16 %v760, %v756
    %v1041 = vpack.c.b16 %v761, %v757
    %v1042 = vpack.c.b16 %v762, %v758
    %v1043 = vpack.c.b16 %v763, %v759
    %v1044 = vpack.c.b16 %v768, %v764
    %v1045 = vpack.c.b16 %v769, %v765
    %v1046 = vpack.c.b16 %v770, %v766
    %v1047 = vpack.c.b16 %v771, %v767
    %v1048 = vpack.c.b16 %v776, %v772
    %v1049 = vpack.c.b16 %v777, %v773
    %v1050 = vpack.c.b16 %v778, %v774
    %v1051 = vpack.c.b16 %v779, %v775
    %v1052 = vpack.c.b16 %v784, %v780
    %v1053 = vpack.c.b16 %v785, %v781
    %v1054 = vpack.c.b16 %v786, %v782
    %v1055 = vpack.c.b16 %v787, %v783
    %v1056 = vpack.c.b16 %v792, %v788
    %v1057 = vpack.c.b16 %v793, %v789
    %v1058 = vpack.c.b16 %v794, %v790
    %v1059 = vpack.c.b16 %v795, %v791
    %v1060 = vpack.c.b16 %v800, %v796
    %v1061 = vpack.c.b16 %v801, %v797
    %v1062 = vpack.c.b16 %v802, %v798
    %v1063 = vpack.c.b16 %v803, %v799
    %v1064 = vpack.c.b16 %v808, %v804
    %v1065 = vpack.c.b16 %v809, %v805
    %v1066 = vpack.c.b16 %v810, %v806
    %v1067 = vpack.c.b16 %v811, %v807
    %v1068 = vpack.c.b16 %v816, %v812
    %v1069 = vpack.c.b16 %v817, %v813
    %v1070 = vpack.c.b16 %v818, %v814
    %v1071 = vpack.c.b16 %v819, %v815
    %v1072 = vpack.c.b16 %v824, %v820
    %v1073 = vpack.c.b16 %v825, %v821
    %v1074 = vpack.c.b16 %v826, %v822
    %v1075 = vpack.c.b16 %v827, %v823
    %v1076 = vpack.c.b16 %v832, %v828
    %v1077 = vpack.c.b16 %v833, %v829
    %v1078 = vpack.c.b16 %v834, %v830
    %v1079 = vpack.c.b16 %v835, %v831
    %v1080 = vpack.c.b16 %v840, %v836
    %v1081 = vpack.c.b16 %v841, %v837
    %v1082 = vpack.c.b16 %v842, %v838
    %v1083 = vpack.c.b16 %v843, %v839
    %v1084 = vpack.c.b16 %v848, %v844
    %v1085 = vpack.c.b16 %v849, %v845
    %v1086 = vpack.c.b16 %v850, %v846
    %v1087 = vpack.c.b16 %v851, %v847
    %v1088 = vpack.c.b16 %v856, %v852
    %v1089 = vpack.c.b16 %v857, %v853
    %v1090 = vpack.c.b16 %v858, %v854
    %v1091 = vpack.c.b16 %v859, %v855
    %v1092 = vpack.c.b16 %v864, %v860
    %v1093 = vpack.c.b16 %v865, %v861
    %v1094 = vpack.c.b16 %v866, %v862
    %v1095 = vpack.c.b16 %v867, %v863
    %v1096 = vpack.c.b16 %v872, %v868
    %v1097 = vpack.c.b16 %v873, %v869
    %v1098 = vpack.c.b16 %v874, %v870
    %v1099 = vpack.c.b16 %v875, %v871
    %v1100 = vpack.c.b16 %v880, %v876
    %v1101 = vpack.c.b16 %v881, %v877
    %v1102 = vpack.c.b16 %v882, %v878
    %v1103 = vpack.c.b16 %v883, %v879
    %v1104 = vpack.c.b16 %v888, %v884
    %v1105 = vpack.c.b16 %v889, %v885
    %v1106 = vpack.c.b16 %v890, %v886
    %v1107 = vpack.c.b16 %v891, %v887
    %v1108 = vpack.c.b16 %v896, %v892
    %v1109 = vpack.c.b16 %v897, %v893
    %v1110 = vpack.c.b16 %v898, %v894
    %v1111 = vpack.c.b16 %v899, %v895
    %v1112 = vpack.c.b16 %v904, %v900
    %v1113 = vpack.c.b16 %v905, %v901
    %v1114 = vpack.c.b16 %v906, %v902
    %v1115 = vpack.c.b16 %v907, %v903
    %v1116 = vpack.c.b16 %v912, %v908
    %v1117 = vpack.c.b16 %v913, %v909
    %v1118 = vpack.c.b16 %v914, %v910
    %v1119 = vpack.c.b16 %v915, %v911
    %v1120 = vpack.c.b16 %v920, %v916
    %v1121 = vpack.c.b16 %v921, %v917
    %v1122 = vpack.c.b16 %v922, %v918
    %v1123 = vpack.c.b16 %v923, %v919
    %v1124 = vpack.c.b16 %v928, %v924
    %v1125 = vpack.c.b16 %v929, %v925
    %v1126 = vpack.c.b16 %v930, %v926
    %v1127 = vpack.c.b16 %v931, %v927
    %vm1324 = vcmask 130048
    %v1326 = vsel %vm1324, %v125, 0
    %1328 = vmatprep.subr.bf16.mxu0 %v933
    %1329 = vmatpush1.bf16.msra.mxu0 %v932
    %1330 = vmatprep.subr.bf16.mxu0 %v937
    %1331 = vmatpush1.bf16.msra.mxu0 %v936
    %1332 = vmatprep.subr.bf16.mxu0 %v941
    %1333 = vmatpush1.bf16.msra.mxu0 %v940
    %1334 = vmatprep.subr.bf16.mxu0 %v945
    %1335 = vmatpush1.bf16.msra.mxu0 %v944
    %1336 = vmatprep.subr.bf16.mxu0 %v949
    %1337 = vmatpush1.bf16.msra.mxu0 %v948
    %1338 = vmatprep.subr.bf16.mxu0 %v953
    %1339 = vmatpush1.bf16.msra.mxu0 %v952
    %1340 = vmatprep.subr.bf16.mxu0 %v957
    %1341 = vmatpush1.bf16.msra.mxu0 %v956
    %1342 = vmatprep.subr.bf16.mxu0 %v961
    %1343 = vmatpush1.bf16.msra.mxu0 %v960
    %1344 = vmatprep.subr.bf16.mxu0 %v965
    %1345 = vmatpush1.bf16.msra.mxu0 %v964
    %1346 = vmatprep.subr.bf16.mxu0 %v969
    %1347 = vmatpush1.bf16.msra.mxu0 %v968
    %1348 = vmatprep.subr.bf16.mxu0 %v973
    %1349 = vmatpush1.bf16.msra.mxu0 %v972
    %1350 = vmatprep.subr.bf16.mxu0 %v977
    %1351 = vmatpush1.bf16.msra.mxu0 %v976
    %1352 = vmatprep.subr.bf16.mxu0 %v981
    %1353 = vmatpush1.bf16.msra.mxu0 %v980
    %1354 = vmatprep.subr.bf16.mxu0 %v985
    %1355 = vmatpush1.bf16.msra.mxu0 %v984
    %1356 = vmatprep.subr.bf16.mxu0 %v989
    %1357 = vmatpush1.bf16.msra.mxu0 %v988
    %1358 = vmatprep.subr.bf16.mxu0 %v993
    %1359 = vmatpush1.bf16.msra.mxu0 %v992
    %1360 = vmatprep.mubr.bf16.mxu0 %v120
    %1361 = vmatmul.mubr.bf16.gmra.mrb[0].mxu0 %v119
    %v1362 = vpop.f32.mrb[0].mxu0
    %v1363 = vadd.f32 %v327, %v1362
    %v1364 = vpop.f32.mrb[0].mxu0
    %v1365 = vadd.f32 %v331, %v1364
    %v1366 = vpop.f32.mrb[0].mxu0
    %v1367 = vpop.f32.mrb[0].mxu0
    %1368 = vdwg.mxu0
    %1369 = vmatprep.subr.bf16.mxu0 %v997
    %1370 = vmatpush1.bf16.msra.mxu0 %v996
    %1371 = vmatprep.subr.bf16.mxu0 %v1001
    %1372 = vmatpush1.bf16.msra.mxu0 %v1000
    %1373 = vmatprep.subr.bf16.mxu0 %v1005
    %1374 = vmatpush1.bf16.msra.mxu0 %v1004
    %1375 = vmatprep.subr.bf16.mxu0 %v1009
    %1376 = vmatpush1.bf16.msra.mxu0 %v1008
    %1377 = vmatprep.subr.bf16.mxu0 %v1013
    %1378 = vmatpush1.bf16.msra.mxu0 %v1012
    %1379 = vmatprep.subr.bf16.mxu0 %v1017
    %1380 = vmatpush1.bf16.msra.mxu0 %v1016
    %1381 = vmatprep.subr.bf16.mxu0 %v1021
    %1382 = vmatpush1.bf16.msra.mxu0 %v1020
    %1383 = vmatprep.subr.bf16.mxu0 %v1025
    %1384 = vmatpush1.bf16.msra.mxu0 %v1024
    %1385 = vmatprep.subr.bf16.mxu0 %v1029
    %1386 = vmatpush1.bf16.msra.mxu0 %v1028
    %1387 = vmatprep.subr.bf16.mxu0 %v1033
    %1388 = vmatpush1.bf16.msra.mxu0 %v1032
    %1389 = vmatprep.subr.bf16.mxu0 %v1037
    %1390 = vmatpush1.bf16.msra.mxu0 %v1036
    %1391 = vmatprep.subr.bf16.mxu0 %v1041
    %1392 = vmatpush1.bf16.msra.mxu0 %v1040
    %1393 = vmatprep.subr.bf16.mxu0 %v1045
    %1394 = vmatpush1.bf16.msra.mxu0 %v1044
    %1395 = vmatprep.subr.bf16.mxu0 %v1049
    %1396 = vmatpush1.bf16.msra.mxu0 %v1048
    %1397 = vmatprep.subr.bf16.mxu0 %v1053
    %1398 = vmatpush1.bf16.msra.mxu0 %v1052
    %1399 = vmatprep.subr.bf16.mxu0 %v1057
    %1400 = vmatpush1.bf16.msra.mxu0 %v1056
    %1401 = vmatprep.mubr.bf16.mxu0 %v122
    %1402 = vmatmul.mubr.bf16.gmra.mrb[0].mxu0 %v121
    %v1403 = vpop.f32.mrb[0].mxu0
    %v1404 = vadd.f32 %v1363, %v1403
    %v1405 = vpop.f32.mrb[0].mxu0
    %v1406 = vadd.f32 %v1365, %v1405
    %v1407 = vpop.f32.mrb[0].mxu0
    %v1408 = vpop.f32.mrb[0].mxu0
    %1409 = vdwg.mxu0
    %1410 = vmatprep.subr.bf16.mxu0 %v1061
    %1411 = vmatpush1.bf16.msra.mxu0 %v1060
    %1412 = vmatprep.subr.bf16.mxu0 %v1065
    %1413 = vmatpush1.bf16.msra.mxu0 %v1064
    %1414 = vmatprep.subr.bf16.mxu0 %v1069
    %1415 = vmatpush1.bf16.msra.mxu0 %v1068
    %1416 = vmatprep.subr.bf16.mxu0 %v1073
    %1417 = vmatpush1.bf16.msra.mxu0 %v1072
    %1418 = vmatprep.subr.bf16.mxu0 %v1077
    %1419 = vmatpush1.bf16.msra.mxu0 %v1076
    %1420 = vmatprep.subr.bf16.mxu0 %v1081
    %1421 = vmatpush1.bf16.msra.mxu0 %v1080
    %1422 = vmatprep.subr.bf16.mxu0 %v1085
    %1423 = vmatpush1.bf16.msra.mxu0 %v1084
    %1424 = vmatprep.subr.bf16.mxu0 %v1089
    %1425 = vmatpush1.bf16.msra.mxu0 %v1088
    %1426 = vmatprep.subr.bf16.mxu0 %v1093
    %1427 = vmatpush1.bf16.msra.mxu0 %v1092
    %1428 = vmatprep.subr.bf16.mxu0 %v1097
    %1429 = vmatpush1.bf16.msra.mxu0 %v1096
    %1430 = vmatprep.subr.bf16.mxu0 %v1101
    %1431 = vmatpush1.bf16.msra.mxu0 %v1100
    %1432 = vmatprep.subr.bf16.mxu0 %v1105
    %1433 = vmatpush1.bf16.msra.mxu0 %v1104
    %1434 = vmatprep.subr.bf16.mxu0 %v1109
    %1435 = vmatpush1.bf16.msra.mxu0 %v1108
    %1436 = vmatprep.subr.bf16.mxu0 %v1113
    %1437 = vmatpush1.bf16.msra.mxu0 %v1112
    %1438 = vmatprep.subr.bf16.mxu0 %v1117
    %1439 = vmatpush1.bf16.msra.mxu0 %v1116
    %1440 = vmatprep.subr.bf16.mxu0 %v1121
    %1441 = vmatpush1.bf16.msra.mxu0 %v1120
    %1442 = vmatprep.mubr.bf16.mxu0 %v124
    %1443 = vmatmul.mubr.bf16.gmra.mrb[0].mxu0 %v123
    %v1444 = vpop.f32.mrb[0].mxu0
    %v1445 = vadd.f32 %v1404, %v1444
    %v1446 = vpop.f32.mrb[0].mxu0
    %v1447 = vadd.f32 %v1406, %v1446
    %v1448 = vpop.f32.mrb[0].mxu0
    %v1449 = vpop.f32.mrb[0].mxu0
    %1450 = vdwg.mxu0
    %1451 = vmatprep.subr.bf16.mxu0 %v1125
    %1452 = vmatpush1.bf16.msra.mxu0 %v1124
    %1453 = vmatprep.subr.bf16.mxu0 0
    %1454 = vmatpush1.bf16.msra.mxu0 0
    %1455 = vmatprep.subr.bf16.mxu0 0
    %1456 = vmatpush1.bf16.msra.mxu0 0
    %1457 = vmatprep.subr.bf16.mxu0 0
    %1458 = vmatpush1.bf16.msra.mxu0 0
    %1459 = vmatprep.subr.bf16.mxu0 0
    %1460 = vmatpush1.bf16.msra.mxu0 0
    %1461 = vmatprep.subr.bf16.mxu0 0
    %1462 = vmatpush1.bf16.msra.mxu0 0
    %1463 = vmatprep.subr.bf16.mxu0 0
    %1464 = vmatpush1.bf16.msra.mxu0 0
    %1465 = vmatprep.subr.bf16.mxu0 0
    %1466 = vmatpush1.bf16.msra.mxu0 0
    %1467 = vmatprep.subr.bf16.mxu0 0
    %1468 = vmatpush1.bf16.msra.mxu0 0
    %1469 = vmatprep.subr.bf16.mxu0 0
    %1470 = vmatpush1.bf16.msra.mxu0 0
    %1471 = vmatprep.subr.bf16.mxu0 0
    %1472 = vmatpush1.bf16.msra.mxu0 0
    %1473 = vmatprep.subr.bf16.mxu0 0
    %1474 = vmatpush1.bf16.msra.mxu0 0
    %1475 = vmatprep.subr.bf16.mxu0 0
    %1476 = vmatpush1.bf16.msra.mxu0 0
    %1477 = vmatprep.subr.bf16.mxu0 0
    %1478 = vmatpush1.bf16.msra.mxu0 0
    %1479 = vmatprep.subr.bf16.mxu0 0
    %1480 = vmatpush1.bf16.msra.mxu0 0
    %1481 = vmatprep.subr.bf16.mxu0 0
    %1482 = vmatpush1.bf16.msra.mxu0 0
    %1483 = vmatprep.mubr.bf16.mxu0 0
    %1484 = vmatmul.mubr.bf16.gmra.mrb[0].mxu0 %v1326
    %v1485 = vpop.f32.mrb[0].mxu0
    %v1486 = vadd.f32 %v1445, %v1485
    %v1487 = vpop.f32.mrb[0].mxu0
    %v1488 = vadd.f32 %v1447, %v1487
    %v1489 = vpop.f32.mrb[0].mxu0
    %v1490 = vpop.f32.mrb[0].mxu0
    %1491 = vdwg.mxu0
    %1492 = vmatprep.subr.bf16.mxu0 %v935
    %1493 = vmatpush1.bf16.msra.mxu0 %v934
    %1494 = vmatprep.subr.bf16.mxu0 %v939
    %1495 = vmatpush1.bf16.msra.mxu0 %v938
    %1496 = vmatprep.subr.bf16.mxu0 %v943
    %1497 = vmatpush1.bf16.msra.mxu0 %v942
    %1498 = vmatprep.subr.bf16.mxu0 %v947
    %1499 = vmatpush1.bf16.msra.mxu0 %v946
    %1500 = vmatprep.subr.bf16.mxu0 %v951
    %1501 = vmatpush1.bf16.msra.mxu0 %v950
    %1502 = vmatprep.subr.bf16.mxu0 %v955
    %1503 = vmatpush1.bf16.msra.mxu0 %v954
    %1504 = vmatprep.subr.bf16.mxu0 %v959
    %1505 = vmatpush1.bf16.msra.mxu0 %v958
    %1506 = vmatprep.subr.bf16.mxu0 %v963
    %1507 = vmatpush1.bf16.msra.mxu0 %v962
    %1508 = vmatprep.subr.bf16.mxu0 %v967
    %1509 = vmatpush1.bf16.msra.mxu0 %v966
    %1510 = vmatprep.subr.bf16.mxu0 %v971
    %1511 = vmatpush1.bf16.msra.mxu0 %v970
    %1512 = vmatprep.subr.bf16.mxu0 %v975
    %1513 = vmatpush1.bf16.msra.mxu0 %v974
    %1514 = vmatprep.subr.bf16.mxu0 %v979
    %1515 = vmatpush1.bf16.msra.mxu0 %v978
    %1516 = vmatprep.subr.bf16.mxu0 %v983
    %1517 = vmatpush1.bf16.msra.mxu0 %v982
    %1518 = vmatprep.subr.bf16.mxu0 %v987
    %1519 = vmatpush1.bf16.msra.mxu0 %v986
    %1520 = vmatprep.subr.bf16.mxu0 %v991
    %1521 = vmatpush1.bf16.msra.mxu0 %v990
    %1522 = vmatprep.subr.bf16.mxu0 %v995
    %1523 = vmatpush1.bf16.msra.mxu0 %v994
    %1524 = vmatprep.mubr.bf16.mxu0 %v120
    %1525 = vmatmul.mubr.bf16.gmra.mrb[0].mxu0 %v119
    %v1526 = vpop.f32.mrb[0].mxu0
    %v1527 = vadd.f32 %v335, %v1526
    %v1528 = vpop.f32.mrb[0].mxu0
    %v1529 = vadd.f32 %v339, %v1528
    %v1530 = vpop.f32.mrb[0].mxu0
    %v1531 = vpop.f32.mrb[0].mxu0
    %1532 = vdwg.mxu0
    %1533 = vmatprep.subr.bf16.mxu0 %v999
    %1534 = vmatpush1.bf16.msra.mxu0 %v998
    %1535 = vmatprep.subr.bf16.mxu0 %v1003
    %1536 = vmatpush1.bf16.msra.mxu0 %v1002
    %1537 = vmatprep.subr.bf16.mxu0 %v1007
    %1538 = vmatpush1.bf16.msra.mxu0 %v1006
    %1539 = vmatprep.subr.bf16.mxu0 %v1011
    %1540 = vmatpush1.bf16.msra.mxu0 %v1010
    %1541 = vmatprep.subr.bf16.mxu0 %v1015
    %1542 = vmatpush1.bf16.msra.mxu0 %v1014
    %1543 = vmatprep.subr.bf16.mxu0 %v1019
    %1544 = vmatpush1.bf16.msra.mxu0 %v1018
    %1545 = vmatprep.subr.bf16.mxu0 %v1023
    %1546 = vmatpush1.bf16.msra.mxu0 %v1022
    %1547 = vmatprep.subr.bf16.mxu0 %v1027
    %1548 = vmatpush1.bf16.msra.mxu0 %v1026
    %1549 = vmatprep.subr.bf16.mxu0 %v1031
    %1550 = vmatpush1.bf16.msra.mxu0 %v1030
    %1551 = vmatprep.subr.bf16.mxu0 %v1035
    %1552 = vmatpush1.bf16.msra.mxu0 %v1034
    %1553 = vmatprep.subr.bf16.mxu0 %v1039
    %1554 = vmatpush1.bf16.msra.mxu0 %v1038
    %1555 = vmatprep.subr.bf16.mxu0 %v1043
    %1556 = vmatpush1.bf16.msra.mxu0 %v1042
    %1557 = vmatprep.subr.bf16.mxu0 %v1047
    %1558 = vmatpush1.bf16.msra.mxu0 %v1046
    %1559 = vmatprep.subr.bf16.mxu0 %v1051
    %1560 = vmatpush1.bf16.msra.mxu0 %v1050
    %1561 = vmatprep.subr.bf16.mxu0 %v1055
    %1562 = vmatpush1.bf16.msra.mxu0 %v1054
    %1563 = vmatprep.subr.bf16.mxu0 %v1059
    %1564 = vmatpush1.bf16.msra.mxu0 %v1058
    %1565 = vmatprep.mubr.bf16.mxu0 %v122
    %1566 = vmatmul.mubr.bf16.gmra.mrb[0].mxu0 %v121
    %v1567 = vpop.f32.mrb[0].mxu0
    %v1568 = vadd.f32 %v1527, %v1567
    %v1569 = vpop.f32.mrb[0].mxu0
    %v1570 = vadd.f32 %v1529, %v1569
    %v1571 = vpop.f32.mrb[0].mxu0
    %v1572 = vpop.f32.mrb[0].mxu0
    %1573 = vdwg.mxu0
    %1574 = vmatprep.subr.bf16.mxu0 %v1063
    %1575 = vmatpush1.bf16.msra.mxu0 %v1062
    %1576 = vmatprep.subr.bf16.mxu0 %v1067
    %1577 = vmatpush1.bf16.msra.mxu0 %v1066
    %1578 = vmatprep.subr.bf16.mxu0 %v1071
    %1579 = vmatpush1.bf16.msra.mxu0 %v1070
    %1580 = vmatprep.subr.bf16.mxu0 %v1075
    %1581 = vmatpush1.bf16.msra.mxu0 %v1074
    %1582 = vmatprep.subr.bf16.mxu0 %v1079
    %1583 = vmatpush1.bf16.msra.mxu0 %v1078
    %1584 = vmatprep.subr.bf16.mxu0 %v1083
    %1585 = vmatpush1.bf16.msra.mxu0 %v1082
    %1586 = vmatprep.subr.bf16.mxu0 %v1087
    %1587 = vmatpush1.bf16.msra.mxu0 %v1086
    %1588 = vmatprep.subr.bf16.mxu0 %v1091
    %1589 = vmatpush1.bf16.msra.mxu0 %v1090
    %1590 = vmatprep.subr.bf16.mxu0 %v1095
    %1591 = vmatpush1.bf16.msra.mxu0 %v1094
    %1592 = vmatprep.subr.bf16.mxu0 %v1099
    %1593 = vmatpush1.bf16.msra.mxu0 %v1098
    %1594 = vmatprep.subr.bf16.mxu0 %v1103
    %1595 = vmatpush1.bf16.msra.mxu0 %v1102
    %1596 = vmatprep.subr.bf16.mxu0 %v1107
    %1597 = vmatpush1.bf16.msra.mxu0 %v1106
    %1598 = vmatprep.subr.bf16.mxu0 %v1111
    %1599 = vmatpush1.bf16.msra.mxu0 %v1110
    %1600 = vmatprep.subr.bf16.mxu0 %v1115
    %1601 = vmatpush1.bf16.msra.mxu0 %v1114
    %1602 = vmatprep.subr.bf16.mxu0 %v1119
    %1603 = vmatpush1.bf16.msra.mxu0 %v1118
    %1604 = vmatprep.subr.bf16.mxu0 %v1123
    %1605 = vmatpush1.bf16.msra.mxu0 %v1122
    %1606 = vmatprep.mubr.bf16.mxu0 %v124
    %1607 = vmatmul.mubr.bf16.gmra.mrb[0].mxu0 %v123
    %v1608 = vpop.f32.mrb[0].mxu0
    %v1609 = vadd.f32 %v1568, %v1608
    %v1610 = vpop.f32.mrb[0].mxu0
    %v1611 = vadd.f32 %v1570, %v1610
    %v1612 = vpop.f32.mrb[0].mxu0
    %v1613 = vpop.f32.mrb[0].mxu0
    %1614 = vdwg.mxu0
    %1615 = vmatprep.subr.bf16.mxu0 %v1127
    %1616 = vmatpush1.bf16.msra.mxu0 %v1126
    %1617 = vmatprep.subr.bf16.mxu0 0
    %1618 = vmatpush1.bf16.msra.mxu0 0
    %1619 = vmatprep.subr.bf16.mxu0 0
    %1620 = vmatpush1.bf16.msra.mxu0 0
    %1621 = vmatprep.subr.bf16.mxu0 0
    %1622 = vmatpush1.bf16.msra.mxu0 0
    %1623 = vmatprep.subr.bf16.mxu0 0
    %1624 = vmatpush1.bf16.msra.mxu0 0
    %1625 = vmatprep.subr.bf16.mxu0 0
    %1626 = vmatpush1.bf16.msra.mxu0 0
    %1627 = vmatprep.subr.bf16.mxu0 0
    %1628 = vmatpush1.bf16.msra.mxu0 0
    %1629 = vmatprep.subr.bf16.mxu0 0
    %1630 = vmatpush1.bf16.msra.mxu0 0
    %1631 = vmatprep.subr.bf16.mxu0 0
    %1632 = vmatpush1.bf16.msra.mxu0 0
    %1633 = vmatprep.subr.bf16.mxu0 0
    %1634 = vmatpush1.bf16.msra.mxu0 0
    %1635 = vmatprep.subr.bf16.mxu0 0
    %1636 = vmatpush1.bf16.msra.mxu0 0
    %1637 = vmatprep.subr.bf16.mxu0 0
    %1638 = vmatpush1.bf16.msra.mxu0 0
    %1639 = vmatprep.subr.bf16.mxu0 0
    %1640 = vmatpush1.bf16.msra.mxu0 0
    %1641 = vmatprep.subr.bf16.mxu0 0
    %1642 = vmatpush1.bf16.msra.mxu0 0
    %1643 = vmatprep.subr.bf16.mxu0 0
    %1644 = vmatpush1.bf16.msra.mxu0 0
    %1645 = vmatprep.subr.bf16.mxu0 0
    %1646 = vmatpush1.bf16.msra.mxu0 0
    %1647 = vmatprep.mubr.bf16.mxu0 0
    %1648 = vmatmul.mubr.bf16.gmra.mrb[0].mxu0 %v1326
    %v1649 = vpop.f32.mrb[0].mxu0
    %v1650 = vadd.f32 %v1609, %v1649
    %v1651 = vpop.f32.mrb[0].mxu0
    %v1652 = vadd.f32 %v1611, %v1651
    %v1653 = vpop.f32.mrb[0].mxu0
    %v1654 = vpop.f32.mrb[0].mxu0
    %1655 = vdwg.mxu0
    %v1656 = vmax.f32 %v1486, 0.0
    %v1657 = vmax.f32 %v1488, 0.0
    %v1658 = vmax.f32 %v1650, 0.0
    %v1659 = vmax.f32 %v1652, 0.0
    %v1660 = vld [vmem:[#allocation11 + $0x4] sm:$0xf]
    %v1661 = vld [vmem:[#allocation11 + $0x8] sm:$0xf]
    %v1662 = vrot.slane %v1656, 4
    %v1663 = vadd.f32 %v1656, %v1662
    %v1664 = vrot.slane %v1663, 2
    %v1665 = vadd.f32 %v1663, %v1664
    %v1666 = vrot.slane %v1665, 1
    %v1667 = vadd.f32 %v1665, %v1666
    %v1668 = vrot.slane %v1657, 4
    %v1669 = vadd.f32 %v1657, %v1668
    %v1670 = vrot.slane %v1669, 2
    %v1671 = vadd.f32 %v1669, %v1670
    %v1672 = vrot.slane %v1671, 1
    %v1673 = vadd.f32 %v1671, %v1672
    %v1674 = vrot.slane %v1658, 4
    %v1675 = vadd.f32 %v1658, %v1674
    %v1676 = vrot.slane %v1675, 2
    %v1677 = vadd.f32 %v1675, %v1676
    %v1678 = vrot.slane %v1677, 1
    %v1679 = vadd.f32 %v1677, %v1678
    %v1680 = vrot.slane %v1659, 4
    %v1681 = vadd.f32 %v1659, %v1680
    %v1682 = vrot.slane %v1681, 2
    %v1683 = vadd.f32 %v1681, %v1682
    %v1684 = vrot.slane %v1683, 1
    %v1685 = vadd.f32 %v1683, %v1684
    %v1686 = vmul.f32 %v1667, 0.125
    %v1687 = vmul.f32 %v1673, 0.125
    %v1688 = vmul.f32 %v1679, 0.125
    %v1689 = vmul.f32 %v1685, 0.125
    %v1690 = vmul.f32 %v1656, %v1656
    %v1691 = vmul.f32 %v1657, %v1657
    %v1692 = vmul.f32 %v1658, %v1658
    %v1693 = vmul.f32 %v1659, %v1659
    %v1694 = vrot.slane %v1690, 4
    %v1695 = vadd.f32 %v1690, %v1694
    %v1696 = vrot.slane %v1695, 2
    %v1697 = vadd.f32 %v1695, %v1696
    %v1698 = vrot.slane %v1697, 1
    %v1699 = vadd.f32 %v1697, %v1698
    %v1700 = vrot.slane %v1691, 4
    %v1701 = vadd.f32 %v1691, %v1700
    %v1702 = vrot.slane %v1701, 2
    %v1703 = vadd.f32 %v1701, %v1702
    %v1704 = vrot.slane %v1703, 1
    %v1705 = vadd.f32 %v1703, %v1704
    %v1706 = vrot.slane %v1692, 4
    %v1707 = vadd.f32 %v1692, %v1706
    %v1708 = vrot.slane %v1707, 2
    %v1709 = vadd.f32 %v1707, %v1708
    %v1710 = vrot.slane %v1709, 1
    %v1711 = vadd.f32 %v1709, %v1710
    %v1712 = vrot.slane %v1693, 4
    %v1713 = vadd.f32 %v1693, %v1712
    %v1714 = vrot.slane %v1713, 2
    %v1715 = vadd.f32 %v1713, %v1714
    %v1716 = vrot.slane %v1715, 1
    %v1717 = vadd.f32 %v1715, %v1716
    %v1718 = vmul.f32 %v1699, 0.125
    %v1719 = vmul.f32 %v1705, 0.125
    %v1720 = vmul.f32 %v1711, 0.125
    %v1721 = vmul.f32 %v1717, 0.125
    %v1722 = vmul.f32 %v1686, %v1686
    %v1723 = vmul.f32 %v1687, %v1687
    %v1724 = vmul.f32 %v1688, %v1688
    %v1725 = vmul.f32 %v1689, %v1689
    %v1726 = vsub.f32 %v1718, %v1722
    %v1727 = vsub.f32 %v1719, %v1723
    %v1728 = vsub.f32 %v1720, %v1724
    %v1729 = vsub.f32 %v1721, %v1725
    %v1730 = vmax.f32 %v1726, 0.0
    %v1731 = vmax.f32 %v1727, 0.0
    %v1732 = vmax.f32 %v1728, 0.0
    %v1733 = vmax.f32 %v1729, 0.0
    %v1734 = vadd.f32 %v1730, 1e-05
    %v1735 = vadd.f32 %v1731, 1e-05
    %v1736 = vadd.f32 %v1732, 1e-05
    %v1737 = vadd.f32 %v1733, 1e-05
    %v1738 = vrsqrt.pop %v1734
    %v1739 = vrsqrt.pop %v1735
    %v1740 = vrsqrt.pop %v1736
    %v1741 = vrsqrt.pop %v1737
    %v1746 = vcombine.low %v1738, %v1739
    %v1747 = vcombine.low %v1740, %v1741
    %v1749 = vunpack.c.l.s4 1966171168
    %v1750 = vunpack.c.0.s8 %v1749
    %v1751 = vlaneseq
    %v1752 = vshrl.u32 %v1751, 7
    %v1753 = vsub.s32 %v1750, %v1752
    %v1754 = vrot.slane %v1746, %v1753
    %v1756 = vunpack.c.l.s4 1966171168
    %v1757 = vunpack.c.0.s8 %v1756
    %v1758 = vlaneseq
    %v1759 = vshrl.u32 %v1758, 7
    %v1760 = vsub.s32 %v1757, %v1759
    %v1761 = vrot.slane %v1747, %v1760
    %v1762 = vcombine.low %v1754, %v1761
    %v1764 = vunpack.c.l.s4 1966171168
    %v1765 = vunpack.c.0.s8 %v1764
    %v1766 = vlaneseq
    %v1767 = vshrl.u32 %v1766, 7
    %v1768 = vsub.s32 %v1765, %v1767
    %v1769 = vrot.slane %v1762, %v1768
    %v1771 = vmul.f32 %v1660, %v1769
    %v1773 = vlaneseq
    %v1774 = vshrl.u32 %v1773, 7
    %v1775 = vsub.s32 0, %v1774
    %v1776 = vrot.slane %v1771, %v1775
    %v1777 = vlaneseq
    %v1778 = vshrl.u32 %v1777, 7
    %v1779 = vsub.s32 1, %v1778
    %v1780 = vrot.slane %v1771, %v1779
    %v1781 = vlaneseq
    %v1782 = vshrl.u32 %v1781, 7
    %v1783 = vsub.s32 2, %v1782
    %v1784 = vrot.slane %v1771, %v1783
    %v1785 = vlaneseq
    %v1786 = vshrl.u32 %v1785, 7
    %v1787 = vsub.s32 3, %v1786
    %v1788 = vrot.slane %v1771, %v1787
    %v1793 = vmul.f32 %v1686, %v1776
    %v1794 = vmul.f32 %v1687, %v1780
    %v1795 = vmul.f32 %v1688, %v1784
    %v1796 = vmul.f32 %v1689, %v1788
    %v1801 = vcombine.low %v1793, %v1794
    %v1802 = vcombine.low %v1795, %v1796
    %v1804 = vunpack.c.l.s4 1966171168
    %v1805 = vunpack.c.0.s8 %v1804
    %v1806 = vlaneseq
    %v1807 = vshrl.u32 %v1806, 7
    %v1808 = vsub.s32 %v1805, %v1807
    %v1809 = vrot.slane %v1801, %v1808
    %v1811 = vunpack.c.l.s4 1966171168
    %v1812 = vunpack.c.0.s8 %v1811
    %v1813 = vlaneseq
    %v1814 = vshrl.u32 %v1813, 7
    %v1815 = vsub.s32 %v1812, %v1814
    %v1816 = vrot.slane %v1802, %v1815
    %v1817 = vcombine.low %v1809, %v1816
    %v1819 = vunpack.c.l.s4 1966171168
    %v1820 = vunpack.c.0.s8 %v1819
    %v1821 = vlaneseq
    %v1822 = vshrl.u32 %v1821, 7
    %v1823 = vsub.s32 %v1820, %v1822
    %v1824 = vrot.slane %v1817, %v1823
    %v1826 = vsub.f32 %v1661, %v1824
    %v1827 = vmul.f32 %v1656, %v1776
    %v1828 = vmul.f32 %v1657, %v1780
    %v1829 = vmul.f32 %v1658, %v1784
    %v1830 = vmul.f32 %v1659, %v1788
    %v1832 = vlaneseq
    %v1833 = vshrl.u32 %v1832, 7
    %v1834 = vsub.s32 0, %v1833
    %v1835 = vrot.slane %v1826, %v1834
    %v1836 = vlaneseq
    %v1837 = vshrl.u32 %v1836, 7
    %v1838 = vsub.s32 1, %v1837
    %v1839 = vrot.slane %v1826, %v1838
    %v1840 = vlaneseq
    %v1841 = vshrl.u32 %v1840, 7
    %v1842 = vsub.s32 2, %v1841
    %v1843 = vrot.slane %v1826, %v1842
    %v1844 = vlaneseq
    %v1845 = vshrl.u32 %v1844, 7
    %v1846 = vsub.s32 3, %v1845
    %v1847 = vrot.slane %v1826, %v1846
    %v1852 = vadd.f32 %v1827, %v1835
    %v1853 = vadd.f32 %v1828, %v1839
    %v1854 = vadd.f32 %v1829, %v1843
    %v1855 = vadd.f32 %v1830, %v1847
    %v1856 = vpack.c.bf16 %v1852, %v1852
    %v1857 = vpack.c.bf16 %v1853, %v1853
    %v1858 = vpack.c.bf16 %v1854, %v1854
    %v1859 = vpack.c.bf16 %v1855, %v1855
    %v1860 = vld [vmem:[%s1] sm:$0xff]
    %v1861 = vld [vmem:[%s1 + $0x8] sm:$0xff]
    %v1864 = vunpack.c.l.b16 %v1860
    %v1865 = vunpack.c.h.b16 %v1860
    %v1866 = vunpack.c.l.b16 %v1861
    %v1867 = vunpack.c.h.b16 %v1861
    %v1868 = vpack.c.b16 %v1864, %v1864
    %v1869 = vpack.c.b16 %v1865, %v1865
    %v1870 = vpack.c.b16 %v1866, %v1866
    %v1871 = vpack.c.b16 %v1867, %v1867
    %v1876 = vmul.bf16 %v1856, %v1868
    %v1877 = vmul.bf16 %v1857, %v1869
    %v1878 = vmul.bf16 %v1858, %v1870
    %v1879 = vmul.bf16 %v1859, %v1871
    %v1880 = vld [vmem:[#allocation11 + $0xc] sm:$0x3]
    %v1881 = vld [vmem:[#allocation7] sm:$0xff]
    %v1882 = vld [vmem:[#allocation7 + $0x8] sm:$0xff]
    %v1883 = vld [vmem:[#allocation7 + $0x10] sm:$0xff]
    %v1884 = vld [vmem:[#allocation7 + $0x18] sm:$0xff]
    %v1885 = vld [vmem:[#allocation7 + $0x20] sm:$0xff]
    %v1886 = vld [vmem:[#allocation7 + $0x28] sm:$0xff]
    %v1887 = vld [vmem:[#allocation7 + $0x30] sm:$0xff]
    %v1888 = vld [vmem:[#allocation7 + $0x38] sm:$0xff]
    %v1889 = vld [vmem:[#allocation7 + $0x40] sm:$0xff]
    %v1890 = vld [vmem:[#allocation7 + $0x48] sm:$0xff]
    %v1891 = vld [vmem:[#allocation7 + $0x50] sm:$0xff]
    %v1892 = vld [vmem:[#allocation7 + $0x58] sm:$0xff]
    %v1893 = vld [vmem:[#allocation7 + $0x60] sm:$0xff]
    %v1894 = vld [vmem:[#allocation7 + $0x68] sm:$0xff]
    %v1895 = vld [vmem:[#allocation7 + $0x70] sm:$0xff]
    %v1896 = vld [vmem:[#allocation7 + $0x78] sm:$0xff]
    %v1897 = vld [vmem:[#allocation7 + $0x80] sm:$0xff]
    %v1898 = vld [vmem:[#allocation7 + $0x88] sm:$0xff]
    %v1899 = vld [vmem:[#allocation7 + $0x90] sm:$0xff]
    %v1900 = vld [vmem:[#allocation7 + $0x98] sm:$0xff]
    %v1901 = vld [vmem:[#allocation7 + $0xa0] sm:$0xff]
    %v1902 = vld [vmem:[#allocation7 + $0xa8] sm:$0xff]
    %v1903 = vld [vmem:[#allocation7 + $0xb0] sm:$0xff]
    %v1904 = vld [vmem:[#allocation7 + $0xb8] sm:$0xff]
    %v1905 = vld [vmem:[#allocation7 + $0xc0] sm:$0xff]
    %v1906 = vld [vmem:[#allocation7 + $0xc8] sm:$0xff]
    %v1907 = vld [vmem:[#allocation7 + $0xd0] sm:$0xff]
    %v1908 = vld [vmem:[#allocation7 + $0xd8] sm:$0xff]
    %v1909 = vld [vmem:[#allocation7 + $0xe0] sm:$0xff]
    %v1910 = vld [vmem:[#allocation7 + $0xe8] sm:$0xff]
    %v1911 = vld [vmem:[#allocation7 + $0xf0] sm:$0xff]
    %v1912 = vld [vmem:[#allocation7 + $0xf8] sm:$0xff]
    %v1913 = vld [vmem:[#allocation7 + $0x100] sm:$0xff]
    %v1914 = vld [vmem:[#allocation7 + $0x108] sm:$0xff]
    %v1915 = vld [vmem:[#allocation7 + $0x110] sm:$0xff]
    %v1916 = vld [vmem:[#allocation7 + $0x118] sm:$0xff]
    %v1917 = vld [vmem:[#allocation7 + $0x120] sm:$0xff]
    %v1918 = vld [vmem:[#allocation7 + $0x128] sm:$0xff]
    %v1919 = vld [vmem:[#allocation7 + $0x130] sm:$0xff]
    %v1920 = vld [vmem:[#allocation7 + $0x138] sm:$0xff]
    %v1921 = vld [vmem:[#allocation7 + $0x140] sm:$0xff]
    %v1922 = vld [vmem:[#allocation7 + $0x148] sm:$0xff]
    %v1923 = vld [vmem:[#allocation7 + $0x150] sm:$0xff]
    %v1924 = vld [vmem:[#allocation7 + $0x158] sm:$0xff]
    %v1925 = vld [vmem:[#allocation7 + $0x160] sm:$0xff]
    %v1926 = vld [vmem:[#allocation7 + $0x168] sm:$0xff]
    %v1927 = vld [vmem:[#allocation7 + $0x170] sm:$0xff]
    %v1928 = vld [vmem:[#allocation7 + $0x178] sm:$0xff]
    %v1929 = vld [vmem:[#allocation7 + $0x180] sm:$0xff]
    %v1930 = vld [vmem:[#allocation7 + $0x188] sm:$0xff]
    %v1931 = vld [vmem:[#allocation7 + $0x190] sm:$0xff]
    %v1932 = vld [vmem:[#allocation7 + $0x198] sm:$0xff]
    %v1933 = vld [vmem:[#allocation7 + $0x1a0] sm:$0xff]
    %v1934 = vld [vmem:[#allocation7 + $0x1a8] sm:$0xff]
    %v1935 = vld [vmem:[#allocation7 + $0x1b0] sm:$0xff]
    %v1936 = vld [vmem:[#allocation7 + $0x1b8] sm:$0xff]
    %v1937 = vld [vmem:[#allocation7 + $0x1c0] sm:$0xff]
    %v1938 = vld [vmem:[#allocation7 + $0x1c8] sm:$0xff]
    %v1939 = vld [vmem:[#allocation7 + $0x1d0] sm:$0xff]
    %v1940 = vld [vmem:[#allocation7 + $0x1d8] sm:$0xff]
    %v1941 = vld [vmem:[#allocation7 + $0x1e0] sm:$0xff]
    %v1942 = vld [vmem:[#allocation7 + $0x1e8] sm:$0xff]
    %v1943 = vld [vmem:[#allocation7 + $0x1f0] sm:$0xff]
    %v1944 = vld [vmem:[#allocation7 + $0x1f8] sm:$0xff]
    %v1946 = vlaneseq
    %v1947 = vshrl.u32 %v1946, 7
    %v1948 = vsub.s32 0, %v1947
    %v1949 = vrot.slane %v1880, %v1948
    %v1950 = vlaneseq
    %v1951 = vshrl.u32 %v1950, 7
    %v1952 = vsub.s32 1, %v1951
    %v1953 = vrot.slane %v1880, %v1952
    %v2020 = vunpack.c.l.b16 %v1881
    %v2021 = vunpack.c.h.b16 %v1881
    %v2022 = vunpack.c.l.b16 %v1882
    %v2023 = vunpack.c.h.b16 %v1882
    %v2024 = vunpack.c.l.b16 %v1883
    %v2025 = vunpack.c.h.b16 %v1883
    %v2026 = vunpack.c.l.b16 %v1884
    %v2027 = vunpack.c.h.b16 %v1884
    %v2028 = vunpack.c.l.b16 %v1885
    %v2029 = vunpack.c.h.b16 %v1885
    %v2030 = vunpack.c.l.b16 %v1886
    %v2031 = vunpack.c.h.b16 %v1886
    %v2032 = vunpack.c.l.b16 %v1887
    %v2033 = vunpack.c.h.b16 %v1887
    %v2034 = vunpack.c.l.b16 %v1888
    %v2035 = vunpack.c.h.b16 %v1888
    %v2036 = vunpack.c.l.b16 %v1889
    %v2037 = vunpack.c.h.b16 %v1889
    %v2038 = vunpack.c.l.b16 %v1890
    %v2039 = vunpack.c.h.b16 %v1890
    %v2040 = vunpack.c.l.b16 %v1891
    %v2041 = vunpack.c.h.b16 %v1891
    %v2042 = vunpack.c.l.b16 %v1892
    %v2043 = vunpack.c.h.b16 %v1892
    %v2044 = vunpack.c.l.b16 %v1893
    %v2045 = vunpack.c.h.b16 %v1893
    %v2046 = vunpack.c.l.b16 %v1894
    %v2047 = vunpack.c.h.b16 %v1894
    %v2048 = vunpack.c.l.b16 %v1895
    %v2049 = vunpack.c.h.b16 %v1895
    %v2050 = vunpack.c.l.b16 %v1896
    %v2051 = vunpack.c.h.b16 %v1896
    %v2052 = vunpack.c.l.b16 %v1897
    %v2053 = vunpack.c.h.b16 %v1897
    %v2054 = vunpack.c.l.b16 %v1898
    %v2055 = vunpack.c.h.b16 %v1898
    %v2056 = vunpack.c.l.b16 %v1899
    %v2057 = vunpack.c.h.b16 %v1899
    %v2058 = vunpack.c.l.b16 %v1900
    %v2059 = vunpack.c.h.b16 %v1900
    %v2060 = vunpack.c.l.b16 %v1901
    %v2061 = vunpack.c.h.b16 %v1901
    %v2062 = vunpack.c.l.b16 %v1902
    %v2063 = vunpack.c.h.b16 %v1902
    %v2064 = vunpack.c.l.b16 %v1903
    %v2065 = vunpack.c.h.b16 %v1903
    %v2066 = vunpack.c.l.b16 %v1904
    %v2067 = vunpack.c.h.b16 %v1904
    %v2068 = vunpack.c.l.b16 %v1905
    %v2069 = vunpack.c.h.b16 %v1905
    %v2070 = vunpack.c.l.b16 %v1906
    %v2071 = vunpack.c.h.b16 %v1906
    %v2072 = vunpack.c.l.b16 %v1907
    %v2073 = vunpack.c.h.b16 %v1907
    %v2074 = vunpack.c.l.b16 %v1908
    %v2075 = vunpack.c.h.b16 %v1908
    %v2076 = vunpack.c.l.b16 %v1909
    %v2077 = vunpack.c.h.b16 %v1909
    %v2078 = vunpack.c.l.b16 %v1910
    %v2079 = vunpack.c.h.b16 %v1910
    %v2080 = vunpack.c.l.b16 %v1911
    %v2081 = vunpack.c.h.b16 %v1911
    %v2082 = vunpack.c.l.b16 %v1912
    %v2083 = vunpack.c.h.b16 %v1912
    %v2084 = vunpack.c.l.b16 %v1913
    %v2085 = vunpack.c.h.b16 %v1913
    %v2086 = vunpack.c.l.b16 %v1914
    %v2087 = vunpack.c.h.b16 %v1914
    %v2088 = vunpack.c.l.b16 %v1915
    %v2089 = vunpack.c.h.b16 %v1915
    %v2090 = vunpack.c.l.b16 %v1916
    %v2091 = vunpack.c.h.b16 %v1916
    %v2092 = vunpack.c.l.b16 %v1917
    %v2093 = vunpack.c.h.b16 %v1917
    %v2094 = vunpack.c.l.b16 %v1918
    %v2095 = vunpack.c.h.b16 %v1918
    %v2096 = vunpack.c.l.b16 %v1919
    %v2097 = vunpack.c.h.b16 %v1919
    %v2098 = vunpack.c.l.b16 %v1920
    %v2099 = vunpack.c.h.b16 %v1920
    %v2100 = vunpack.c.l.b16 %v1921
    %v2101 = vunpack.c.h.b16 %v1921
    %v2102 = vunpack.c.l.b16 %v1922
    %v2103 = vunpack.c.h.b16 %v1922
    %v2104 = vunpack.c.l.b16 %v1923
    %v2105 = vunpack.c.h.b16 %v1923
    %v2106 = vunpack.c.l.b16 %v1924
    %v2107 = vunpack.c.h.b16 %v1924
    %v2108 = vunpack.c.l.b16 %v1925
    %v2109 = vunpack.c.h.b16 %v1925
    %v2110 = vunpack.c.l.b16 %v1926
    %v2111 = vunpack.c.h.b16 %v1926
    %v2112 = vunpack.c.l.b16 %v1927
    %v2113 = vunpack.c.h.b16 %v1927
    %v2114 = vunpack.c.l.b16 %v1928
    %v2115 = vunpack.c.h.b16 %v1928
    %v2116 = vunpack.c.l.b16 %v1929
    %v2117 = vunpack.c.h.b16 %v1929
    %v2118 = vunpack.c.l.b16 %v1930
    %v2119 = vunpack.c.h.b16 %v1930
    %v2120 = vunpack.c.l.b16 %v1931
    %v2121 = vunpack.c.h.b16 %v1931
    %v2122 = vunpack.c.l.b16 %v1932
    %v2123 = vunpack.c.h.b16 %v1932
    %v2124 = vunpack.c.l.b16 %v1933
    %v2125 = vunpack.c.h.b16 %v1933
    %v2126 = vunpack.c.l.b16 %v1934
    %v2127 = vunpack.c.h.b16 %v1934
    %v2128 = vunpack.c.l.b16 %v1935
    %v2129 = vunpack.c.h.b16 %v1935
    %v2130 = vunpack.c.l.b16 %v1936
    %v2131 = vunpack.c.h.b16 %v1936
    %v2132 = vunpack.c.l.b16 %v1937
    %v2133 = vunpack.c.h.b16 %v1937
    %v2134 = vunpack.c.l.b16 %v1938
    %v2135 = vunpack.c.h.b16 %v1938
    %v2136 = vunpack.c.l.b16 %v1939
    %v2137 = vunpack.c.h.b16 %v1939
    %v2138 = vunpack.c.l.b16 %v1940
    %v2139 = vunpack.c.h.b16 %v1940
    %v2140 = vunpack.c.l.b16 %v1941
    %v2141 = vunpack.c.h.b16 %v1941
    %v2142 = vunpack.c.l.b16 %v1942
    %v2143 = vunpack.c.h.b16 %v1942
    %v2144 = vunpack.c.l.b16 %v1943
    %v2145 = vunpack.c.h.b16 %v1943
    %v2146 = vunpack.c.l.b16 %v1944
    %v2147 = vunpack.c.h.b16 %v1944
    %v2148 = vpack.c.b16 %v2022, %v2020
    %v2149 = vpack.c.b16 %v2023, %v2021
    %v2150 = vpack.c.b16 %v2026, %v2024
    %v2151 = vpack.c.b16 %v2027, %v2025
    %v2152 = vpack.c.b16 %v2030, %v2028
    %v2153 = vpack.c.b16 %v2031, %v2029
    %v2154 = vpack.c.b16 %v2034, %v2032
    %v2155 = vpack.c.b16 %v2035, %v2033
    %v2156 = vpack.c.b16 %v2038, %v2036
    %v2157 = vpack.c.b16 %v2039, %v2037
    %v2158 = vpack.c.b16 %v2042, %v2040
    %v2159 = vpack.c.b16 %v2043, %v2041
    %v2160 = vpack.c.b16 %v2046, %v2044
    %v2161 = vpack.c.b16 %v2047, %v2045
    %v2162 = vpack.c.b16 %v2050, %v2048
    %v2163 = vpack.c.b16 %v2051, %v2049
    %v2164 = vpack.c.b16 %v2054, %v2052
    %v2165 = vpack.c.b16 %v2055, %v2053
    %v2166 = vpack.c.b16 %v2058, %v2056
    %v2167 = vpack.c.b16 %v2059, %v2057
    %v2168 = vpack.c.b16 %v2062, %v2060
    %v2169 = vpack.c.b16 %v2063, %v2061
    %v2170 = vpack.c.b16 %v2066, %v2064
    %v2171 = vpack.c.b16 %v2067, %v2065
    %v2172 = vpack.c.b16 %v2070, %v2068
    %v2173 = vpack.c.b16 %v2071, %v2069
    %v2174 = vpack.c.b16 %v2074, %v2072
    %v2175 = vpack.c.b16 %v2075, %v2073
    %v2176 = vpack.c.b16 %v2078, %v2076
    %v2177 = vpack.c.b16 %v2079, %v2077
    %v2178 = vpack.c.b16 %v2082, %v2080
    %v2179 = vpack.c.b16 %v2083, %v2081
    %v2180 = vpack.c.b16 %v2086, %v2084
    %v2181 = vpack.c.b16 %v2087, %v2085
    %v2182 = vpack.c.b16 %v2090, %v2088
    %v2183 = vpack.c.b16 %v2091, %v2089
    %v2184 = vpack.c.b16 %v2094, %v2092
    %v2185 = vpack.c.b16 %v2095, %v2093
    %v2186 = vpack.c.b16 %v2098, %v2096
    %v2187 = vpack.c.b16 %v2099, %v2097
    %v2188 = vpack.c.b16 %v2102, %v2100
    %v2189 = vpack.c.b16 %v2103, %v2101
    %v2190 = vpack.c.b16 %v2106, %v2104
    %v2191 = vpack.c.b16 %v2107, %v2105
    %v2192 = vpack.c.b16 %v2110, %v2108
    %v2193 = vpack.c.b16 %v2111, %v2109
    %v2194 = vpack.c.b16 %v2114, %v2112
    %v2195 = vpack.c.b16 %v2115, %v2113
    %v2196 = vpack.c.b16 %v2118, %v2116
    %v2197 = vpack.c.b16 %v2119, %v2117
    %v2198 = vpack.c.b16 %v2122, %v2120
    %v2199 = vpack.c.b16 %v2123, %v2121
    %v2200 = vpack.c.b16 %v2126, %v2124
    %v2201 = vpack.c.b16 %v2127, %v2125
    %v2202 = vpack.c.b16 %v2130, %v2128
    %v2203 = vpack.c.b16 %v2131, %v2129
    %v2204 = vpack.c.b16 %v2134, %v2132
    %v2205 = vpack.c.b16 %v2135, %v2133
    %v2206 = vpack.c.b16 %v2138, %v2136
    %v2207 = vpack.c.b16 %v2139, %v2137
    %v2208 = vpack.c.b16 %v2142, %v2140
    %v2209 = vpack.c.b16 %v2143, %v2141
    %v2210 = vpack.c.b16 %v2146, %v2144
    %v2211 = vpack.c.b16 %v2147, %v2145
    %2276 = vmatprep.subr.bf16.mxu0 %v2149
    %2277 = vmatpush1.bf16.msra.mxu0 %v2148
    %2278 = vmatprep.subr.bf16.mxu0 %v2151
    %2279 = vmatpush1.bf16.msra.mxu0 %v2150
    %2280 = vmatprep.subr.bf16.mxu0 %v2153
    %2281 = vmatpush1.bf16.msra.mxu0 %v2152
    %2282 = vmatprep.subr.bf16.mxu0 %v2155
    %2283 = vmatpush1.bf16.msra.mxu0 %v2154
    %2284 = vmatprep.subr.bf16.mxu0 %v2157
    %2285 = vmatpush1.bf16.msra.mxu0 %v2156
    %2286 = vmatprep.subr.bf16.mxu0 %v2159
    %2287 = vmatpush1.bf16.msra.mxu0 %v2158
    %2288 = vmatprep.subr.bf16.mxu0 %v2161
    %2289 = vmatpush1.bf16.msra.mxu0 %v2160
    %2290 = vmatprep.subr.bf16.mxu0 %v2163
    %2291 = vmatpush1.bf16.msra.mxu0 %v2162
    %2292 = vmatprep.subr.bf16.mxu0 %v2165
    %2293 = vmatpush1.bf16.msra.mxu0 %v2164
    %2294 = vmatprep.subr.bf16.mxu0 %v2167
    %2295 = vmatpush1.bf16.msra.mxu0 %v2166
    %2296 = vmatprep.subr.bf16.mxu0 %v2169
    %2297 = vmatpush1.bf16.msra.mxu0 %v2168
    %2298 = vmatprep.subr.bf16.mxu0 %v2171
    %2299 = vmatpush1.bf16.msra.mxu0 %v2170
    %2300 = vmatprep.subr.bf16.mxu0 %v2173
    %2301 = vmatpush1.bf16.msra.mxu0 %v2172
    %2302 = vmatprep.subr.bf16.mxu0 %v2175
    %2303 = vmatpush1.bf16.msra.mxu0 %v2174
    %2304 = vmatprep.subr.bf16.mxu0 %v2177
    %2305 = vmatpush1.bf16.msra.mxu0 %v2176
    %2306 = vmatprep.subr.bf16.mxu0 %v2179
    %2307 = vmatpush1.bf16.msra.mxu0 %v2178
    %2308 = vmatprep.mubr.bf16.mxu0 %v1877
    %2309 = vmatmul.mubr.bf16.gmra.mrb[0].mxu0 %v1876
    %v2310 = vpop.f32.mrb[0].mxu0
    %v2311 = vadd.f32 %v1949, %v2310
    %v2312 = vpop.f32.mrb[0].mxu0
    %v2313 = vadd.f32 %v1953, %v2312
    %v2314 = vpop.f32.mrb[0].mxu0
    %v2315 = vpop.f32.mrb[0].mxu0
    %2316 = vdwg.mxu0
    %2317 = vmatprep.subr.bf16.mxu0 %v2181
    %2318 = vmatpush1.bf16.msra.mxu0 %v2180
    %2319 = vmatprep.subr.bf16.mxu0 %v2183
    %2320 = vmatpush1.bf16.msra.mxu0 %v2182
    %2321 = vmatprep.subr.bf16.mxu0 %v2185
    %2322 = vmatpush1.bf16.msra.mxu0 %v2184
    %2323 = vmatprep.subr.bf16.mxu0 %v2187
    %2324 = vmatpush1.bf16.msra.mxu0 %v2186
    %2325 = vmatprep.subr.bf16.mxu0 %v2189
    %2326 = vmatpush1.bf16.msra.mxu0 %v2188
    %2327 = vmatprep.subr.bf16.mxu0 %v2191
    %2328 = vmatpush1.bf16.msra.mxu0 %v2190
    %2329 = vmatprep.subr.bf16.mxu0 %v2193
    %2330 = vmatpush1.bf16.msra.mxu0 %v2192
    %2331 = vmatprep.subr.bf16.mxu0 %v2195
    %2332 = vmatpush1.bf16.msra.mxu0 %v2194
    %2333 = vmatprep.subr.bf16.mxu0 %v2197
    %2334 = vmatpush1.bf16.msra.mxu0 %v2196
    %2335 = vmatprep.subr.bf16.mxu0 %v2199
    %2336 = vmatpush1.bf16.msra.mxu0 %v2198
    %2337 = vmatprep.subr.bf16.mxu0 %v2201
    %2338 = vmatpush1.bf16.msra.mxu0 %v2200
    %2339 = vmatprep.subr.bf16.mxu0 %v2203
    %2340 = vmatpush1.bf16.msra.mxu0 %v2202
    %2341 = vmatprep.subr.bf16.mxu0 %v2205
    %2342 = vmatpush1.bf16.msra.mxu0 %v2204
    %2343 = vmatprep.subr.bf16.mxu0 %v2207
    %2344 = vmatpush1.bf16.msra.mxu0 %v2206
    %2345 = vmatprep.subr.bf16.mxu0 %v2209
    %2346 = vmatpush1.bf16.msra.mxu0 %v2208
    %2347 = vmatprep.subr.bf16.mxu0 %v2211
    %2348 = vmatpush1.bf16.msra.mxu0 %v2210
    %2349 = vmatprep.mubr.bf16.mxu0 %v1879
    %2350 = vmatmul.mubr.bf16.gmra.mrb[0].mxu0 %v1878
    %v2351 = vpop.f32.mrb[0].mxu0
    %v2352 = vadd.f32 %v2311, %v2351
    %v2353 = vpop.f32.mrb[0].mxu0
    %v2354 = vadd.f32 %v2313, %v2353
    %v2355 = vpop.f32.mrb[0].mxu0
    %v2356 = vpop.f32.mrb[0].mxu0
    %2357 = vdwg.mxu0
    %v2358 = vmax.f32 %v2352, 0.0
    %v2359 = vmax.f32 %v2354, 0.0
    %v2360 = vld [vmem:[#allocation11 + $0xe] sm:$0x3]
    %v2361 = vld [vmem:[#allocation11 + $0x10] sm:$0x3]
    %v2362 = vrot.slane %v2358, 4
    %v2363 = vadd.f32 %v2358, %v2362
    %v2364 = vrot.slane %v2363, 2
    %v2365 = vadd.f32 %v2363, %v2364
    %v2366 = vrot.slane %v2365, 1
    %v2367 = vadd.f32 %v2365, %v2366
    %v2368 = vrot.slane %v2359, 4
    %v2369 = vadd.f32 %v2359, %v2368
    %v2370 = vrot.slane %v2369, 2
    %v2371 = vadd.f32 %v2369, %v2370
    %v2372 = vrot.slane %v2371, 1
    %v2373 = vadd.f32 %v2371, %v2372
    %v2374 = vmul.f32 %v2367, 0.125
    %v2375 = vmul.f32 %v2373, 0.125
    %v2376 = vmul.f32 %v2358, %v2358
    %v2377 = vmul.f32 %v2359, %v2359
    %v2378 = vrot.slane %v2376, 4
    %v2379 = vadd.f32 %v2376, %v2378
    %v2380 = vrot.slane %v2379, 2
    %v2381 = vadd.f32 %v2379, %v2380
    %v2382 = vrot.slane %v2381, 1
    %v2383 = vadd.f32 %v2381, %v2382
    %v2384 = vrot.slane %v2377, 4
    %v2385 = vadd.f32 %v2377, %v2384
    %v2386 = vrot.slane %v2385, 2
    %v2387 = vadd.f32 %v2385, %v2386
    %v2388 = vrot.slane %v2387, 1
    %v2389 = vadd.f32 %v2387, %v2388
    %v2390 = vmul.f32 %v2383, 0.125
    %v2391 = vmul.f32 %v2389, 0.125
    %v2392 = vmul.f32 %v2374, %v2374
    %v2393 = vmul.f32 %v2375, %v2375
    %v2394 = vsub.f32 %v2390, %v2392
    %v2395 = vsub.f32 %v2391, %v2393
    %v2396 = vmax.f32 %v2394, 0.0
    %v2397 = vmax.f32 %v2395, 0.0
    %v2398 = vadd.f32 %v2396, 1e-05
    %v2399 = vadd.f32 %v2397, 1e-05
    %v2400 = vrsqrt.pop %v2398
    %v2401 = vrsqrt.pop %v2399
    %v2404 = vcombine.low %v2400, %v2401
    %v2406 = vunpack.c.l.s4 1966171168
    %v2407 = vunpack.c.0.s8 %v2406
    %v2408 = vlaneseq
    %v2409 = vshrl.u32 %v2408, 7
    %v2410 = vsub.s32 %v2407, %v2409
    %v2411 = vrot.slane %v2404, %v2410
    %v2413 = vunpack.c.l.s4 1966171168
    %v2414 = vunpack.c.0.s8 %v2413
    %v2415 = vlaneseq
    %v2416 = vshrl.u32 %v2415, 7
    %v2417 = vsub.s32 %v2414, %v2416
    %v2418 = vrot.slane %v2411, %v2417
    %v2420 = vmul.f32 %v2360, %v2418
    %v2422 = vlaneseq
    %v2423 = vshrl.u32 %v2422, 7
    %v2424 = vsub.s32 0, %v2423
    %v2425 = vrot.slane %v2420, %v2424
    %v2426 = vlaneseq
    %v2427 = vshrl.u32 %v2426, 7
    %v2428 = vsub.s32 1, %v2427
    %v2429 = vrot.slane %v2420, %v2428
    %v2432 = vmul.f32 %v2374, %v2425
    %v2433 = vmul.f32 %v2375, %v2429
    %v2436 = vcombine.low %v2432, %v2433
    %v2438 = vunpack.c.l.s4 1966171168
    %v2439 = vunpack.c.0.s8 %v2438
    %v2440 = vlaneseq
    %v2441 = vshrl.u32 %v2440, 7
    %v2442 = vsub.s32 %v2439, %v2441
    %v2443 = vrot.slane %v2436, %v2442
    %v2445 = vunpack.c.l.s4 1966171168
    %v2446 = vunpack.c.0.s8 %v2445
    %v2447 = vlaneseq
    %v2448 = vshrl.u32 %v2447, 7
    %v2449 = vsub.s32 %v2446, %v2448
    %v2450 = vrot.slane %v2443, %v2449
    %v2452 = vsub.f32 %v2361, %v2450
    %v2453 = vmul.f32 %v2358, %v2425
    %v2454 = vmul.f32 %v2359, %v2429
    %v2456 = vlaneseq
    %v2457 = vshrl.u32 %v2456, 7
    %v2458 = vsub.s32 0, %v2457
    %v2459 = vrot.slane %v2452, %v2458
    %v2460 = vlaneseq
    %v2461 = vshrl.u32 %v2460, 7
    %v2462 = vsub.s32 1, %v2461
    %v2463 = vrot.slane %v2452, %v2462
    %v2466 = vadd.f32 %v2453, %v2459
    %v2467 = vadd.f32 %v2454, %v2463
    %v2468 = vpack.c.bf16 %v2466, %v2466
    %v2469 = vpack.c.bf16 %v2467, %v2467
    %v2470 = vld [vmem:[%s2] sm:$0xff]
    %v2472 = vunpack.c.l.b16 %v2470
    %v2473 = vunpack.c.h.b16 %v2470
    %v2474 = vpack.c.b16 %v2472, %v2472
    %v2475 = vpack.c.b16 %v2473, %v2473
    %v2478 = vmul.bf16 %v2468, %v2474
    %v2479 = vmul.bf16 %v2469, %v2475
    %v2480 = vld [vmem:[#allocation11 + $0x12] sm:$0x1]
    %v2481 = vld [vmem:[#allocation8] sm:$0xf]
    %v2482 = vld [vmem:[#allocation8 + $0x4] sm:$0xf]
    %v2483 = vld [vmem:[#allocation8 + $0x8] sm:$0xf]
    %v2484 = vld [vmem:[#allocation8 + $0xc] sm:$0xf]
    %v2485 = vld [vmem:[#allocation8 + $0x10] sm:$0xf]
    %v2486 = vld [vmem:[#allocation8 + $0x14] sm:$0xf]
    %v2487 = vld [vmem:[#allocation8 + $0x18] sm:$0xf]
    %v2488 = vld [vmem:[#allocation8 + $0x1c] sm:$0xf]
    %v2489 = vld [vmem:[#allocation8 + $0x20] sm:$0xf]
    %v2490 = vld [vmem:[#allocation8 + $0x24] sm:$0xf]
    %v2491 = vld [vmem:[#allocation8 + $0x28] sm:$0xf]
    %v2492 = vld [vmem:[#allocation8 + $0x2c] sm:$0xf]
    %v2493 = vld [vmem:[#allocation8 + $0x30] sm:$0xf]
    %v2494 = vld [vmem:[#allocation8 + $0x34] sm:$0xf]
    %v2495 = vld [vmem:[#allocation8 + $0x38] sm:$0xf]
    %v2496 = vld [vmem:[#allocation8 + $0x3c] sm:$0xf]
    %v2497 = vld [vmem:[#allocation8 + $0x40] sm:$0xf]
    %v2498 = vld [vmem:[#allocation8 + $0x44] sm:$0xf]
    %v2499 = vld [vmem:[#allocation8 + $0x48] sm:$0xf]
    %v2500 = vld [vmem:[#allocation8 + $0x4c] sm:$0xf]
    %v2501 = vld [vmem:[#allocation8 + $0x50] sm:$0xf]
    %v2502 = vld [vmem:[#allocation8 + $0x54] sm:$0xf]
    %v2503 = vld [vmem:[#allocation8 + $0x58] sm:$0xf]
    %v2504 = vld [vmem:[#allocation8 + $0x5c] sm:$0xf]
    %v2505 = vld [vmem:[#allocation8 + $0x60] sm:$0xf]
    %v2506 = vld [vmem:[#allocation8 + $0x64] sm:$0xf]
    %v2507 = vld [vmem:[#allocation8 + $0x68] sm:$0xf]
    %v2508 = vld [vmem:[#allocation8 + $0x6c] sm:$0xf]
    %v2509 = vld [vmem:[#allocation8 + $0x70] sm:$0xf]
    %v2510 = vld [vmem:[#allocation8 + $0x74] sm:$0xf]
    %v2511 = vld [vmem:[#allocation8 + $0x78] sm:$0xf]
    %v2512 = vld [vmem:[#allocation8 + $0x7c] sm:$0xf]
    %v2514 = vlaneseq
    %v2515 = vshrl.u32 %v2514, 7
    %v2516 = vsub.s32 0, %v2515
    %v2517 = vrot.slane %v2480, %v2516
    %v2551 = vunpack.c.l.b16 %v2481
    %v2552 = vunpack.c.l.b16 %v2482
    %v2553 = vunpack.c.l.b16 %v2483
    %v2554 = vunpack.c.l.b16 %v2484
    %v2555 = vunpack.c.l.b16 %v2485
    %v2556 = vunpack.c.l.b16 %v2486
    %v2557 = vunpack.c.l.b16 %v2487
    %v2558 = vunpack.c.l.b16 %v2488
    %v2559 = vunpack.c.l.b16 %v2489
    %v2560 = vunpack.c.l.b16 %v2490
    %v2561 = vunpack.c.l.b16 %v2491
    %v2562 = vunpack.c.l.b16 %v2492
    %v2563 = vunpack.c.l.b16 %v2493
    %v2564 = vunpack.c.l.b16 %v2494
    %v2565 = vunpack.c.l.b16 %v2495
    %v2566 = vunpack.c.l.b16 %v2496
    %v2567 = vunpack.c.l.b16 %v2497
    %v2568 = vunpack.c.l.b16 %v2498
    %v2569 = vunpack.c.l.b16 %v2499
    %v2570 = vunpack.c.l.b16 %v2500
    %v2571 = vunpack.c.l.b16 %v2501
    %v2572 = vunpack.c.l.b16 %v2502
    %v2573 = vunpack.c.l.b16 %v2503
    %v2574 = vunpack.c.l.b16 %v2504
    %v2575 = vunpack.c.l.b16 %v2505
    %v2576 = vunpack.c.l.b16 %v2506
    %v2577 = vunpack.c.l.b16 %v2507
    %v2578 = vunpack.c.l.b16 %v2508
    %v2579 = vunpack.c.l.b16 %v2509
    %v2580 = vunpack.c.l.b16 %v2510
    %v2581 = vunpack.c.l.b16 %v2511
    %v2582 = vunpack.c.l.b16 %v2512
    %v2583 = vpack.c.b16 %v2552, %v2551
    %v2584 = vpack.c.b16 %v2554, %v2553
    %v2585 = vpack.c.b16 %v2556, %v2555
    %v2586 = vpack.c.b16 %v2558, %v2557
    %v2587 = vpack.c.b16 %v2560, %v2559
    %v2588 = vpack.c.b16 %v2562, %v2561
    %v2589 = vpack.c.b16 %v2564, %v2563
    %v2590 = vpack.c.b16 %v2566, %v2565
    %v2591 = vpack.c.b16 %v2568, %v2567
    %v2592 = vpack.c.b16 %v2570, %v2569
    %v2593 = vpack.c.b16 %v2572, %v2571
    %v2594 = vpack.c.b16 %v2574, %v2573
    %v2595 = vpack.c.b16 %v2576, %v2575
    %v2596 = vpack.c.b16 %v2578, %v2577
    %v2597 = vpack.c.b16 %v2580, %v2579
    %v2598 = vpack.c.b16 %v2582, %v2581
    %2615 = vmatprep.subr.bf16.mxu0 0
    %2616 = vmatpush1.bf16.msra.mxu0 %v2583
    %2617 = vmatprep.subr.bf16.mxu0 0
    %2618 = vmatpush1.bf16.msra.mxu0 %v2584
    %2619 = vmatprep.subr.bf16.mxu0 0
    %2620 = vmatpush1.bf16.msra.mxu0 %v2585
    %2621 = vmatprep.subr.bf16.mxu0 0
    %2622 = vmatpush1.bf16.msra.mxu0 %v2586
    %2623 = vmatprep.subr.bf16.mxu0 0
    %2624 = vmatpush1.bf16.msra.mxu0 %v2587
    %2625 = vmatprep.subr.bf16.mxu0 0
    %2626 = vmatpush1.bf16.msra.mxu0 %v2588
    %2627 = vmatprep.subr.bf16.mxu0 0
    %2628 = vmatpush1.bf16.msra.mxu0 %v2589
    %2629 = vmatprep.subr.bf16.mxu0 0
    %2630 = vmatpush1.bf16.msra.mxu0 %v2590
    %2631 = vmatprep.subr.bf16.mxu0 0
    %2632 = vmatpush1.bf16.msra.mxu0 %v2591
    %2633 = vmatprep.subr.bf16.mxu0 0
    %2634 = vmatpush1.bf16.msra.mxu0 %v2592
    %2635 = vmatprep.subr.bf16.mxu0 0
    %2636 = vmatpush1.bf16.msra.mxu0 %v2593
    %2637 = vmatprep.subr.bf16.mxu0 0
    %2638 = vmatpush1.bf16.msra.mxu0 %v2594
    %2639 = vmatprep.subr.bf16.mxu0 0
    %2640 = vmatpush1.bf16.msra.mxu0 %v2595
    %2641 = vmatprep.subr.bf16.mxu0 0
    %2642 = vmatpush1.bf16.msra.mxu0 %v2596
    %2643 = vmatprep.subr.bf16.mxu0 0
    %2644 = vmatpush1.bf16.msra.mxu0 %v2597
    %2645 = vmatprep.subr.bf16.mxu0 0
    %2646 = vmatpush1.bf16.msra.mxu0 %v2598
    %2647 = vmatprep.mubr.bf16.mxu0 %v2479
    %2648 = vmatmul.mubr.bf16.gmra.mrb[0].mxu0 %v2478
    %v2649 = vpop.f32.mrb[0].mxu0
    %v2650 = vadd.f32 %v2517, %v2649
    %v2651 = vpop.f32.mrb[0].mxu0
    %v2652 = vpop.f32.mrb[0].mxu0
    %v2653 = vpop.f32.mrb[0].mxu0
    %2654 = vdwg.mxu0
    %v2655 = vmax.f32 %v2650, 0.0
    %v2656 = vld [vmem:[#allocation11 + $0x13] sm:$0x1]
    %v2657 = vld [vmem:[#allocation11 + $0x14] sm:$0x1]
    %v2658 = vrot.slane %v2655, 4
    %v2659 = vadd.f32 %v2655, %v2658
    %v2660 = vrot.slane %v2659, 2
    %v2661 = vadd.f32 %v2659, %v2660
    %v2662 = vrot.slane %v2661, 1
    %v2663 = vadd.f32 %v2661, %v2662
    %v2664 = vmul.f32 %v2663, 0.125
    %v2665 = vmul.f32 %v2655, %v2655
    %v2666 = vrot.slane %v2665, 4
    %v2667 = vadd.f32 %v2665, %v2666
    %v2668 = vrot.slane %v2667, 2
    %v2669 = vadd.f32 %v2667, %v2668
    %v2670 = vrot.slane %v2669, 1
    %v2671 = vadd.f32 %v2669, %v2670
    %v2672 = vmul.f32 %v2671, 0.125
    %v2673 = vmul.f32 %v2664, %v2664
    %v2674 = vsub.f32 %v2672, %v2673
    %v2675 = vmax.f32 %v2674, 0.0
    %v2676 = vadd.f32 %v2675, 1e-05
    %v2677 = vrsqrt.pop %v2676
    %v2678 = vmul.f32 %v2656, %v2677
    %v2679 = vmul.f32 %v2664, %v2678
    %v2680 = vsub.f32 %v2657, %v2679
    %v2682 = vlaneseq
    %v2683 = vshrl.u32 %v2682, 7
    %v2684 = vsub.s32 0, %v2683
    %v2685 = vrot.slane %v2678, %v2684
    %v2687 = vmul.f32 %v2655, %v2685
    %v2689 = vlaneseq
    %v2690 = vshrl.u32 %v2689, 7
    %v2691 = vsub.s32 0, %v2690
    %v2692 = vrot.slane %v2680, %v2691
    %v2694 = vadd.f32 %v2687, %v2692
    %v2695 = vpack.c.bf16 %v2694, %v2694
    %v2696 = vld [vmem:[%s3] sm:$0xf]
    %v2697 = vmul.bf16 %v2695, %v2696
    %v2698 = vld [vmem:[#allocation11 + $0x15] sm:$0x1]
    %v2699 = vld [vmem:[#allocation10] sm:$0xf]
    %v2700 = vld [vmem:[#allocation10 + $0x4] sm:$0xf]
    %v2701 = vld [vmem:[#allocation10 + $0x8] sm:$0xf]
    %v2702 = vld [vmem:[#allocation10 + $0xc] sm:$0xf]
    %v2703 = vld [vmem:[#allocation10 + $0x10] sm:$0xf]
    %v2704 = vld [vmem:[#allocation10 + $0x14] sm:$0xf]
    %v2705 = vld [vmem:[#allocation10 + $0x18] sm:$0xf]
    %v2706 = vld [vmem:[#allocation10 + $0x1c] sm:$0xf]
    %v2707 = vld [vmem:[#allocation10 + $0x20] sm:$0xf]
    %v2708 = vld [vmem:[#allocation10 + $0x24] sm:$0xf]
    %v2709 = vld [vmem:[#allocation10 + $0x28] sm:$0xf]
    %v2710 = vld [vmem:[#allocation10 + $0x2c] sm:$0xf]
    %v2711 = vld [vmem:[#allocation10 + $0x30] sm:$0xf]
    %v2712 = vld [vmem:[#allocation10 + $0x34] sm:$0xf]
    %v2713 = vld [vmem:[#allocation10 + $0x38] sm:$0xf]
    %v2714 = vld [vmem:[#allocation10 + $0x3c] sm:$0xf]
    %v2716 = vlaneseq
    %v2717 = vshrl.u32 %v2716, 7
    %v2718 = vsub.s32 0, %v2717
    %v2719 = vrot.slane %v2698, %v2718
    %v2737 = vunpack.c.l.b16 %v2699
    %v2738 = vunpack.c.l.b16 %v2700
    %v2739 = vunpack.c.l.b16 %v2701
    %v2740 = vunpack.c.l.b16 %v2702
    %v2741 = vunpack.c.l.b16 %v2703
    %v2742 = vunpack.c.l.b16 %v2704
    %v2743 = vunpack.c.l.b16 %v2705
    %v2744 = vunpack.c.l.b16 %v2706
    %v2745 = vunpack.c.l.b16 %v2707
    %v2746 = vunpack.c.l.b16 %v2708
    %v2747 = vunpack.c.l.b16 %v2709
    %v2748 = vunpack.c.l.b16 %v2710
    %v2749 = vunpack.c.l.b16 %v2711
    %v2750 = vunpack.c.l.b16 %v2712
    %v2751 = vunpack.c.l.b16 %v2713
    %v2752 = vunpack.c.l.b16 %v2714
    %v2753 = vpack.c.b16 %v2738, %v2737
    %v2754 = vpack.c.b16 %v2740, %v2739
    %v2755 = vpack.c.b16 %v2742, %v2741
    %v2756 = vpack.c.b16 %v2744, %v2743
    %v2757 = vpack.c.b16 %v2746, %v2745
    %v2758 = vpack.c.b16 %v2748, %v2747
    %v2759 = vpack.c.b16 %v2750, %v2749
    %v2760 = vpack.c.b16 %v2752, %v2751
    %2769 = vmatprep.subr.bf16.mxu0 0
    %2770 = vmatpush1.bf16.msra.mxu0 %v2753
    %2771 = vmatprep.subr.bf16.mxu0 0
    %2772 = vmatpush1.bf16.msra.mxu0 %v2754
    %2773 = vmatprep.subr.bf16.mxu0 0
    %2774 = vmatpush1.bf16.msra.mxu0 %v2755
    %2775 = vmatprep.subr.bf16.mxu0 0
    %2776 = vmatpush1.bf16.msra.mxu0 %v2756
    %2777 = vmatprep.subr.bf16.mxu0 0
    %2778 = vmatpush1.bf16.msra.mxu0 %v2757
    %2779 = vmatprep.subr.bf16.mxu0 0
    %2780 = vmatpush1.bf16.msra.mxu0 %v2758
    %2781 = vmatprep.subr.bf16.mxu0 0
    %2782 = vmatpush1.bf16.msra.mxu0 %v2759
    %2783 = vmatprep.subr.bf16.mxu0 0
    %2784 = vmatpush1.bf16.msra.mxu0 %v2760
    %2785 = vmatprep.subr.bf16.mxu0 0
    %2786 = vmatpush1.bf16.msra.mxu0 0
    %2787 = vmatprep.subr.bf16.mxu0 0
    %2788 = vmatpush1.bf16.msra.mxu0 0
    %2789 = vmatprep.subr.bf16.mxu0 0
    %2790 = vmatpush1.bf16.msra.mxu0 0
    %2791 = vmatprep.subr.bf16.mxu0 0
    %2792 = vmatpush1.bf16.msra.mxu0 0
    %2793 = vmatprep.subr.bf16.mxu0 0
    %2794 = vmatpush1.bf16.msra.mxu0 0
    %2795 = vmatprep.subr.bf16.mxu0 0
    %2796 = vmatpush1.bf16.msra.mxu0 0
    %2797 = vmatprep.subr.bf16.mxu0 0
    %2798 = vmatpush1.bf16.msra.mxu0 0
    %2799 = vmatprep.subr.bf16.mxu0 0
    %2800 = vmatpush1.bf16.msra.mxu0 0
    %2801 = vmatprep.mubr.bf16.mxu0 0
    %2802 = vmatmul.mubr.bf16.gmra.mrb[0].mxu0 %v2697
    %v2803 = vpop.f32.mrb[0].mxu0
    %v2804 = vadd.f32 %v2719, %v2803
    %v2805 = vpop.f32.mrb[0].mxu0
    %v2806 = vpop.f32.mrb[0].mxu0
    %v2807 = vpop.f32.mrb[0].mxu0
    %2808 = vdwg.mxu0
    %v2809 = vmax.f32 %v2804, 0.0
    %2810 = vst [vmem:[#allocation13] sm:$0xff] %v2809
    // Predicated region
    $region62: #{method_mlp_forward.1} parent=1 // pred_check
      _
    $region63: #{method_mlp_forward.1} parent=1 // pred_check_branch
      %2812 = sbr.rel (0) target = $region65
    $region64: #{method_mlp_forward.1} parent=1 // pred_region
      %s2814 = ssub.s32 128, 128
      %2815 = vsyncadd [#allocation4], %s2814
      %s2817 = sshll.u32 [#allocation13], 4
      %s2818 = int_to_ptr.vmem [resolvable:$true] %s2817
      %2820 = dma.vmem_to_hbm [thread:$0]  %s2818, 128, %s9, [#allocation4]
    $region65: #{method_mlp_forward.1} parent=1 // pred_fallthru
      _
    // Predicated region
    $region66: #{method_mlp_forward.1} parent=1 // pred_check
      _
    $region67: #{method_mlp_forward.1} parent=1 // pred_check_branch
      %2822 = sbr.rel (0) target = $region69
    $region68: #{method_mlp_forward.1} parent=1 // pred_region
      %2823 = dma.done [#allocation4], 128
    $region69: #{method_mlp_forward.1} parent=1 // pred_fallthru
      _
    %2824 = vsyncpa [#allocation3], 1
    %2825 = vsyncpa [#allocation6], 1
    %2826 = vsyncpa [#allocation9], 1
    %2827 = vsyncpa [#allocation12], 1
    %2828 = vsyncpa [#allocation4], 1

</llo_original>
